<compile_context>
chip_gen: v7x
topology: tpu7x:2x2x1
jax: 0.10.0
libtpu: 0.0.40
codegen_flags: <defaults>
</compile_context>

<pallas_src>
import jax
import jax.numpy as jnp
from jax import lax
from jax.experimental import pallas as pl
from jax.experimental.pallas import tpu as pltpu


# ----------------------------- Pallas kernel --------------------------------
def _rvgae_kernel(
    # inputs
    src_idx_ref, dst_idx_ref,                  # VMEM (B,1) int32 each
    x_ref, adj_ref, eps_ref,                   # (N,F) f32, (R*N,N) bf16, (N,D) f32
    w1_ref, w2_ref, wdec_ref, whead_ref,       # bf16 weight slabs
    bias_ref,                                  # (4,128) f32 bias slab
    # outputs
    enc_ref,                                   # (N, 3D) : [mean | logstd | z]
    dec_ref,                                   # (B, 1+R): [sigmoid(link) | type logits]
):
    N, F = x_ref.shape
    D = eps_ref.shape[1]
    R = adj_ref.shape[0] // N
    B = src_idx_ref.shape[0]
    H = w1_ref.shape[1]
    bf16 = jnp.bfloat16
    f32 = jnp.float32

    adj_bf = adj_ref[...]                      # (R*N, N) bf16, rows ordered r-major

    # bias rows (kept f32)
    b1 = bias_ref[0:1, 0:H]                    # (1, H)
    b2 = bias_ref[1:2, 0:2 * D]                # (1, 2D)
    bd = bias_ref[2:3, :]                      # (1, 128)
    bh = bias_ref[3:4, 0:1 + R]                # (1, 1+R)

    def rgcn(h_bf, w_ref, bias, c_in):
        # w_ref rows: [0:c_in]=root, then R stacked relation weights of c_in rows each.
        # out = h @ root + bias + sum_r (A_r @ h) @ W_r   (PyG RGCNConv, aggr='mean')
        root = w_ref[0:c_in, :]                                        # (c_in, c_out) bf16
        out = jnp.dot(h_bf, root, preferred_element_type=f32)          # (N, c_out)
        agg = jnp.dot(adj_bf, h_bf, preferred_element_type=f32)        # (R*N, c_in) one stacked push
        for r in range(R):                                             # R tiny accumulating matmuls
            w_r = w_ref[c_in * (r + 1):c_in * (r + 2), :]              # (c_in, c_out) bf16
            out = out + jnp.dot(agg[r * N:(r + 1) * N, :].astype(bf16), w_r,
                                preferred_element_type=f32)
        return out + bias

    # ---------------- encoder ----------------
    h = jnp.maximum(rgcn(x_ref[...].astype(bf16), w1_ref, b1, F), 0.0)  # (N, H), ReLU
    ml = rgcn(h.astype(bf16), w2_ref, b2, H)                            # (N, 2D): fused mean|logstd
    mean = ml[:, 0:D]
    logstd = ml[:, D:2 * D]
    std = jnp.exp(logstd)                      # spec applies exp without clamp; semantics kept
    z = mean + eps_ref[...] * std

    enc_ref[:, 0:2 * D] = ml                   # one store for mean|logstd (already contiguous)
    enc_ref[:, 2 * D:3 * D] = z                # one store for z

    # ---------------- decoder ----------------
    # gather z rows for positive edges via one-hot matmul (no serialized dynamic copies)
    node_iota = lax.broadcasted_iota(jnp.int32, (B, N), 1)
    src_onehot = (node_iota == src_idx_ref[...]).astype(bf16)           # (B, N)
    dst_onehot = (node_iota == dst_idx_ref[...]).astype(bf16)
    z_bf = z.astype(bf16)
    src = jnp.dot(src_onehot, z_bf, preferred_element_type=f32)         # (B, D)
    dst = jnp.dot(dst_onehot, z_bf, preferred_element_type=f32)         # (B, D)

    # concat([src,dst]) @ Wd  ==  src @ Wd[:D] + dst @ Wd[D:]
    wd_src = wdec_ref[0:D, :]                   # (D, 128) bf16
    wd_dst = wdec_ref[D:2 * D, :]
    share = (jnp.dot(src.astype(bf16), wd_src, preferred_element_type=f32)
             + jnp.dot(dst.astype(bf16), wd_dst, preferred_element_type=f32) + bd)
    share = jnp.maximum(share, 0.0)            # ReLU

    head = jnp.dot(share.astype(bf16), whead_ref[...],                  # (B, 1+R)
                   preferred_element_type=f32) + bh

    # single full-tile store; sigmoid only on the link column
    col = lax.broadcasted_iota(jnp.int32, head.shape, 1)
    dec_ref[...] = jnp.where(col == 0, jax.nn.sigmoid(head), head)


# ------------------------------ wrapper --------------------------------------
def rvgae_forward(x, edge_index, edge_type, pos_edge_index, params, eps):
    N, F = x.shape
    R, _, H = params["wb"].shape
    D = params["wm"].shape[2]
    B = pos_edge_index.shape[1]

    # dense per-relation adjacency with mean normalization (PyG RGCNConv aggr='mean'),
    # flattened r-major to (R*N, N) for the stacked in-kernel aggregation, cast to bf16.
    # TODO(synk): at scale keep this sparse (per-relation edge lists) instead of O(R*N^2).
    src_n, dst_n = edge_index[0], edge_index[1]
    adj = jnp.zeros((R, N, N), jnp.float32).at[edge_type, dst_n, src_n].add(1.0)
    deg = adj.sum(axis=2, keepdims=True)
    adj = adj / jnp.maximum(deg, 1.0)
    adj_rn = adj.reshape(R * N, N).astype(jnp.bfloat16)

    # ---- packed bf16 weight slabs (root | stacked relation weights) ----
    bf16 = jnp.bfloat16
    w1 = jnp.concatenate(
        [params["rb"], params["wb"].reshape(R * F, H)], axis=0).astype(bf16)      # ((R+1)F, H)
    root2 = jnp.concatenate([params["rm"], params["rl"]], axis=1)                 # (H, 2D)
    wrel2 = jnp.concatenate([params["wm"], params["wl"]], axis=2).reshape(R * H, 2 * D)
    w2 = jnp.concatenate([root2, wrel2], axis=0).astype(bf16)                     # ((R+1)H, 2D)
    wdec = params["wd"].astype(bf16)                                              # (2D, 128)
    whead = jnp.concatenate([params["wlk"], params["wty"]], axis=1).astype(bf16)  # (128, 1+R)

    # ---- one tiny f32 bias slab ----
    biases = jnp.zeros((4, 128), jnp.float32)
    biases = biases.at[0, :H].set(params["bb"])
    biases = biases.at[1, :2 * D].set(jnp.concatenate([params["bm"], params["bl"]]))
    biases = biases.at[2, :].set(params["bd"])
    biases = biases.at[3, :1 + R].set(jnp.concatenate([params["blk"], params["bty"]]))

    src_idx = pos_edge_index[0].astype(jnp.int32).reshape(B, 1)
    dst_idx = pos_edge_index[1].astype(jnp.int32).reshape(B, 1)

    kernel_inputs = (src_idx, dst_idx, x, adj_rn, eps, w1, w2, wdec, whead, biases)

    out_shape = (
        jax.ShapeDtypeStruct((N, 3 * D), jnp.float32),   # mean | logstd | z
        jax.ShapeDtypeStruct((B, 1 + R), jnp.float32),   # link | type
    )

    # vmem limit from actual footprint (headroom x4 for intermediates), not a flat 32 MiB
    in_bytes = sum(a.size * a.dtype.itemsize for a in kernel_inputs)
    out_bytes = N * 3 * D * 4 + B * (1 + R) * 4
    vmem_limit = int(min(max(4 * (in_bytes + out_bytes), 4 << 20), 128 << 20))

    vmem = pl.BlockSpec(memory_space=pltpu.MemorySpace.VMEM)

    enc, dec = pl.pallas_call(
        _rvgae_kernel,
        out_shape=out_shape,
        in_specs=[vmem] * len(kernel_inputs),
        out_specs=(vmem, vmem),
        compiler_params=pltpu.CompilerParams(vmem_limit_bytes=vmem_limit),
    )(*kernel_inputs)

    mean = enc[:, 0:D]
    logstd = enc[:, D:2 * D]
    z = enc[:, 2 * D:3 * D]
    link_pred = dec[:, 0]
    type_pred = dec[:, 1:1 + R]
    return link_pred, type_pred, mean, logstd, z


# ------------------------------ params ---------------------------------------
def init_params(key, F, H, D, R):
    ks = jax.random.split(key, 12)

    def lin(k, shape, scale):
        return (scale * jax.random.normal(k, shape, jnp.float32)).astype(jnp.float32)

    return {
        # rgcn_base: F -> H
        "wb": lin(ks[0], (R, F, H), 0.1), "rb": lin(ks[1], (F, H), 0.1),
        "bb": jnp.zeros((H,), jnp.float32),
        # rgcn_mean: H -> D
        "wm": lin(ks[2], (R, H, D), 0.1), "rm": lin(ks[3], (H, D), 0.1),
        "bm": jnp.zeros((D,), jnp.float32),
        # rgcn_logstd: H -> D
        "wl": lin(ks[4], (R, H, D), 0.1), "rl": lin(ks[5], (H, D), 0.1),
        "bl": jnp.zeros((D,), jnp.float32),
        # shared_decoder: Linear(2D, 128) + ReLU
        "wd": lin(ks[6], (2 * D, 128), 0.1), "bd": jnp.zeros((128,), jnp.float32),
        # link_out: Linear(128, 1) + Sigmoid
        "wlk": lin(ks[7], (128, 1), 0.1), "blk": jnp.zeros((1,), jnp.float32),
        # type_out: Linear(128, R)
        "wty": lin(ks[8], (128, R), 0.1), "bty": jnp.zeros((R,), jnp.float32),
    }


# ------------------------------ main ------------------------------------------
if __name__ == "__main__":
    N, F, H, D, R = 16, 8, 32, 16, 4   # nodes, in, hidden, latent, relations
    E, B = 40, 8                       # edges, positive edges

    key = jax.random.PRNGKey(0)
    k_x, k_ei, k_et, k_pe, k_eps, k_par = jax.random.split(key, 6)

    x = jax.random.normal(k_x, (N, F), jnp.float32)
    edge_index = jax.random.randint(k_ei, (2, E), 0, N, jnp.int32)
    edge_type = jax.random.randint(k_et, (E,), 0, R, jnp.int32)
    pos_edge_index = jax.random.randint(k_pe, (2, B), 0, N, jnp.int32)
    eps = jax.random.normal(k_eps, (N, D), jnp.float32)  # torch.randn_like(std), deterministic

    params = init_params(k_par, F, H, D, R)

    link_pred, type_pred, mean, logstd, z = rvgae_forward(
        x, edge_index, edge_type, pos_edge_index, params, eps
    )
    jax.block_until_ready((link_pred, type_pred, mean, logstd, z))

    assert link_pred.shape == (B,)
    assert type_pred.shape == (B, R)
    assert mean.shape == (N, D) and logstd.shape == (N, D) and z.shape == (N, D)
    assert bool(jnp.all(jnp.isfinite(link_pred)))
    assert bool(jnp.all(jnp.isfinite(z)))
    print("KERNEL_OK")
</pallas_src>

<mosaic_0001>
module attributes {stable_mosaic.version = 11 : i64} {
  func.func @_rvgae_kernel(%arg0: memref<8x1xi32, #tpu.memory_space<vmem>>, %arg1: memref<8x1xi32, #tpu.memory_space<vmem>>, %arg2: memref<16x8xf32, #tpu.memory_space<vmem>>, %arg3: memref<64x16xbf16, #tpu.memory_space<vmem>>, %arg4: memref<16x16xf32, #tpu.memory_space<vmem>>, %arg5: memref<40x32xbf16, #tpu.memory_space<vmem>>, %arg6: memref<160x32xbf16, #tpu.memory_space<vmem>>, %arg7: memref<32x128xbf16, #tpu.memory_space<vmem>>, %arg8: memref<128x5xbf16, #tpu.memory_space<vmem>>, %arg9: memref<4x128xf32, #tpu.memory_space<vmem>>, %arg10: memref<16x48xf32, #tpu.memory_space<vmem>>, %arg11: memref<8x5xf32, #tpu.memory_space<vmem>>) attributes {dimension_semantics = [], scalar_prefetch = 0 : i64, scratch_operands = 0 : i64, tpu.core_type = #tpu.core_type<tc>} {
    %c0 = arith.constant 0 : index
    %c0_0 = arith.constant 0 : index
    %0 = vector.load %arg3[%c0, %c0_0] : memref<64x16xbf16, #tpu.memory_space<vmem>>, vector<64x16xbf16>
    %c0_1 = arith.constant 0 : index
    %c0_2 = arith.constant 0 : index
    %1 = vector.load %arg9[%c0_1, %c0_2] : memref<4x128xf32, #tpu.memory_space<vmem>>, vector<1x32xf32>
    %c1 = arith.constant 1 : index
    %c0_3 = arith.constant 0 : index
    %2 = vector.load %arg9[%c1, %c0_3] : memref<4x128xf32, #tpu.memory_space<vmem>>, vector<1x32xf32>
    %c2 = arith.constant 2 : index
    %c0_4 = arith.constant 0 : index
    %3 = vector.load %arg9[%c2, %c0_4] : memref<4x128xf32, #tpu.memory_space<vmem>>, vector<1x128xf32>
    %c3 = arith.constant 3 : index
    %c0_5 = arith.constant 0 : index
    %4 = vector.load %arg9[%c3, %c0_5] : memref<4x128xf32, #tpu.memory_space<vmem>>, vector<1x5xf32>
    %c0_6 = arith.constant 0 : index
    %c0_7 = arith.constant 0 : index
    %5 = vector.load %arg2[%c0_6, %c0_7] : memref<16x8xf32, #tpu.memory_space<vmem>>, vector<16x8xf32>
    %6 = arith.truncf %5 : vector<16x8xf32> to vector<16x8xbf16>
    %c0_8 = arith.constant 0 : index
    %c0_9 = arith.constant 0 : index
    %7 = vector.load %arg5[%c0_8, %c0_9] : memref<40x32xbf16, #tpu.memory_space<vmem>>, vector<8x32xbf16>
    %cst = arith.constant dense<0.000000e+00> : vector<16x32xf32>
    %8 = tpu.matmul %6, %7, %cst {dimension_numbers = #tpu.dot_dimension_numbers<[1], [0], [0], [1], [0, 0, 1, 1], [], []>} : vector<16x8xbf16>, vector<8x32xbf16>, vector<16x32xf32> -> vector<16x32xf32>
    %cst_10 = arith.constant dense<0.000000e+00> : vector<64x8xf32>
    %9 = tpu.matmul %0, %6, %cst_10 {dimension_numbers = #tpu.dot_dimension_numbers<[1], [0], [0], [1], [0, 0, 1, 1], [], []>} : vector<64x16xbf16>, vector<16x8xbf16>, vector<64x8xf32> -> vector<64x8xf32>
    %c8 = arith.constant 8 : index
    %c0_11 = arith.constant 0 : index
    %10 = vector.load %arg5[%c8, %c0_11] : memref<40x32xbf16, #tpu.memory_space<vmem>>, vector<8x32xbf16>
    %11 = vector.extract_strided_slice %9 {offsets = [0, 0], sizes = [16, 8], strides = [1, 1]} : vector<64x8xf32> to vector<16x8xf32>
    %12 = arith.truncf %11 : vector<16x8xf32> to vector<16x8xbf16>
    %cst_12 = arith.constant dense<0.000000e+00> : vector<16x32xf32>
    %13 = tpu.matmul %12, %10, %cst_12 {dimension_numbers = #tpu.dot_dimension_numbers<[1], [0], [0], [1], [0, 0, 1, 1], [], []>} : vector<16x8xbf16>, vector<8x32xbf16>, vector<16x32xf32> -> vector<16x32xf32>
    %14 = arith.addf %8, %13 : vector<16x32xf32>
    %c16 = arith.constant 16 : index
    %c0_13 = arith.constant 0 : index
    %15 = vector.load %arg5[%c16, %c0_13] : memref<40x32xbf16, #tpu.memory_space<vmem>>, vector<8x32xbf16>
    %16 = vector.extract_strided_slice %9 {offsets = [16, 0], sizes = [16, 8], strides = [1, 1]} : vector<64x8xf32> to vector<16x8xf32>
    %17 = arith.truncf %16 : vector<16x8xf32> to vector<16x8xbf16>
    %cst_14 = arith.constant dense<0.000000e+00> : vector<16x32xf32>
    %18 = tpu.matmul %17, %15, %cst_14 {dimension_numbers = #tpu.dot_dimension_numbers<[1], [0], [0], [1], [0, 0, 1, 1], [], []>} : vector<16x8xbf16>, vector<8x32xbf16>, vector<16x32xf32> -> vector<16x32xf32>
    %19 = arith.addf %14, %18 : vector<16x32xf32>
    %c24 = arith.constant 24 : index
    %c0_15 = arith.constant 0 : index
    %20 = vector.load %arg5[%c24, %c0_15] : memref<40x32xbf16, #tpu.memory_space<vmem>>, vector<8x32xbf16>
    %21 = vector.extract_strided_slice %9 {offsets = [32, 0], sizes = [16, 8], strides = [1, 1]} : vector<64x8xf32> to vector<16x8xf32>
    %22 = arith.truncf %21 : vector<16x8xf32> to vector<16x8xbf16>
    %cst_16 = arith.constant dense<0.000000e+00> : vector<16x32xf32>
    %23 = tpu.matmul %22, %20, %cst_16 {dimension_numbers = #tpu.dot_dimension_numbers<[1], [0], [0], [1], [0, 0, 1, 1], [], []>} : vector<16x8xbf16>, vector<8x32xbf16>, vector<16x32xf32> -> vector<16x32xf32>
    %24 = arith.addf %19, %23 : vector<16x32xf32>
    %c32 = arith.constant 32 : index
    %c0_17 = arith.constant 0 : index
    %25 = vector.load %arg5[%c32, %c0_17] : memref<40x32xbf16, #tpu.memory_space<vmem>>, vector<8x32xbf16>
    %26 = vector.extract_strided_slice %9 {offsets = [48, 0], sizes = [16, 8], strides = [1, 1]} : vector<64x8xf32> to vector<16x8xf32>
    %27 = arith.truncf %26 : vector<16x8xf32> to vector<16x8xbf16>
    %cst_18 = arith.constant dense<0.000000e+00> : vector<16x32xf32>
    %28 = tpu.matmul %27, %25, %cst_18 {dimension_numbers = #tpu.dot_dimension_numbers<[1], [0], [0], [1], [0, 0, 1, 1], [], []>} : vector<16x8xbf16>, vector<8x32xbf16>, vector<16x32xf32> -> vector<16x32xf32>
    %29 = arith.addf %24, %28 : vector<16x32xf32>
    %30 = vector.broadcast %1 : vector<1x32xf32> to vector<16x32xf32>
    %31 = arith.addf %29, %30 : vector<16x32xf32>
    %cst_19 = arith.constant 0.000000e+00 : f32
    %32 = vector.broadcast %cst_19 : f32 to vector<16x32xf32>
    %33 = arith.maximumf %31, %32 : vector<16x32xf32>
    %34 = arith.truncf %33 : vector<16x32xf32> to vector<16x32xbf16>
    %c0_20 = arith.constant 0 : index
    %c0_21 = arith.constant 0 : index
    %35 = vector.load %arg6[%c0_20, %c0_21] : memref<160x32xbf16, #tpu.memory_space<vmem>>, vector<32x32xbf16>
    %cst_22 = arith.constant dense<0.000000e+00> : vector<16x32xf32>
    %36 = tpu.matmul %34, %35, %cst_22 {dimension_numbers = #tpu.dot_dimension_numbers<[1], [0], [0], [1], [0, 0, 1, 1], [], []>} : vector<16x32xbf16>, vector<32x32xbf16>, vector<16x32xf32> -> vector<16x32xf32>
    %cst_23 = arith.constant dense<0.000000e+00> : vector<64x32xf32>
    %37 = tpu.matmul %0, %34, %cst_23 {dimension_numbers = #tpu.dot_dimension_numbers<[1], [0], [0], [1], [0, 0, 1, 1], [], []>} : vector<64x16xbf16>, vector<16x32xbf16>, vector<64x32xf32> -> vector<64x32xf32>
    %c32_24 = arith.constant 32 : index
    %c0_25 = arith.constant 0 : index
    %38 = vector.load %arg6[%c32_24, %c0_25] : memref<160x32xbf16, #tpu.memory_space<vmem>>, vector<32x32xbf16>
    %39 = vector.extract_strided_slice %37 {offsets = [0, 0], sizes = [16, 32], strides = [1, 1]} : vector<64x32xf32> to vector<16x32xf32>
    %40 = arith.truncf %39 : vector<16x32xf32> to vector<16x32xbf16>
    %cst_26 = arith.constant dense<0.000000e+00> : vector<16x32xf32>
    %41 = tpu.matmul %40, %38, %cst_26 {dimension_numbers = #tpu.dot_dimension_numbers<[1], [0], [0], [1], [0, 0, 1, 1], [], []>} : vector<16x32xbf16>, vector<32x32xbf16>, vector<16x32xf32> -> vector<16x32xf32>
    %42 = arith.addf %36, %41 : vector<16x32xf32>
    %c64 = arith.constant 64 : index
    %c0_27 = arith.constant 0 : index
    %43 = vector.load %arg6[%c64, %c0_27] : memref<160x32xbf16, #tpu.memory_space<vmem>>, vector<32x32xbf16>
    %44 = vector.extract_strided_slice %37 {offsets = [16, 0], sizes = [16, 32], strides = [1, 1]} : vector<64x32xf32> to vector<16x32xf32>
    %45 = arith.truncf %44 : vector<16x32xf32> to vector<16x32xbf16>
    %cst_28 = arith.constant dense<0.000000e+00> : vector<16x32xf32>
    %46 = tpu.matmul %45, %43, %cst_28 {dimension_numbers = #tpu.dot_dimension_numbers<[1], [0], [0], [1], [0, 0, 1, 1], [], []>} : vector<16x32xbf16>, vector<32x32xbf16>, vector<16x32xf32> -> vector<16x32xf32>
    %47 = arith.addf %42, %46 : vector<16x32xf32>
    %c96 = arith.constant 96 : index
    %c0_29 = arith.constant 0 : index
    %48 = vector.load %arg6[%c96, %c0_29] : memref<160x32xbf16, #tpu.memory_space<vmem>>, vector<32x32xbf16>
    %49 = vector.extract_strided_slice %37 {offsets = [32, 0], sizes = [16, 32], strides = [1, 1]} : vector<64x32xf32> to vector<16x32xf32>
    %50 = arith.truncf %49 : vector<16x32xf32> to vector<16x32xbf16>
    %cst_30 = arith.constant dense<0.000000e+00> : vector<16x32xf32>
    %51 = tpu.matmul %50, %48, %cst_30 {dimension_numbers = #tpu.dot_dimension_numbers<[1], [0], [0], [1], [0, 0, 1, 1], [], []>} : vector<16x32xbf16>, vector<32x32xbf16>, vector<16x32xf32> -> vector<16x32xf32>
    %52 = arith.addf %47, %51 : vector<16x32xf32>
    %c128 = arith.constant 128 : index
    %c0_31 = arith.constant 0 : index
    %53 = vector.load %arg6[%c128, %c0_31] : memref<160x32xbf16, #tpu.memory_space<vmem>>, vector<32x32xbf16>
    %54 = vector.extract_strided_slice %37 {offsets = [48, 0], sizes = [16, 32], strides = [1, 1]} : vector<64x32xf32> to vector<16x32xf32>
    %55 = arith.truncf %54 : vector<16x32xf32> to vector<16x32xbf16>
    %cst_32 = arith.constant dense<0.000000e+00> : vector<16x32xf32>
    %56 = tpu.matmul %55, %53, %cst_32 {dimension_numbers = #tpu.dot_dimension_numbers<[1], [0], [0], [1], [0, 0, 1, 1], [], []>} : vector<16x32xbf16>, vector<32x32xbf16>, vector<16x32xf32> -> vector<16x32xf32>
    %57 = arith.addf %52, %56 : vector<16x32xf32>
    %58 = vector.broadcast %2 : vector<1x32xf32> to vector<16x32xf32>
    %59 = arith.addf %57, %58 : vector<16x32xf32>
    %60 = vector.extract_strided_slice %59 {offsets = [0, 0], sizes = [16, 16], strides = [1, 1]} : vector<16x32xf32> to vector<16x16xf32>
    %61 = vector.extract_strided_slice %59 {offsets = [0, 16], sizes = [16, 16], strides = [1, 1]} : vector<16x32xf32> to vector<16x16xf32>
    %62 = math.exp %61 : vector<16x16xf32>
    %c0_33 = arith.constant 0 : index
    %c0_34 = arith.constant 0 : index
    %63 = vector.load %arg4[%c0_33, %c0_34] : memref<16x16xf32, #tpu.memory_space<vmem>>, vector<16x16xf32>
    %64 = arith.mulf %63, %62 : vector<16x16xf32>
    %65 = arith.addf %60, %64 : vector<16x16xf32>
    %c0_35 = arith.constant 0 : index
    %c0_36 = arith.constant 0 : index
    %66 = vector.load %arg10[%c0_35, %c0_36] : memref<16x48xf32, #tpu.memory_space<vmem>>, vector<16x32xf32>
    tpu.vector_store %arg10[%c0_35, %c0_36], %59 {strides = array<i32>} : memref<16x48xf32, #tpu.memory_space<vmem>>, vector<16x32xf32>,
    %c0_37 = arith.constant 0 : index
    %c32_38 = arith.constant 32 : index
    %67 = vector.load %arg10[%c0_37, %c32_38] : memref<16x48xf32, #tpu.memory_space<vmem>>, vector<16x16xf32>
    tpu.vector_store %arg10[%c0_37, %c32_38], %65 {strides = array<i32>} : memref<16x48xf32, #tpu.memory_space<vmem>>, vector<16x16xf32>,
    %68 = tpu.iota {dimensions = array<i32: 1>} : vector<8x16xi32>
    %c0_39 = arith.constant 0 : index
    %c0_40 = arith.constant 0 : index
    %69 = vector.load %arg0[%c0_39, %c0_40] : memref<8x1xi32, #tpu.memory_space<vmem>>, vector<8x1xi32>
    %70 = vector.broadcast %69 : vector<8x1xi32> to vector<8x16xi32>
    %71 = arith.cmpi eq, %68, %70 : vector<8x16xi32>
    %72 = arith.extui %71 : vector<8x16xi1> to vector<8x16xi32>
    %73 = arith.sitofp %72 : vector<8x16xi32> to vector<8x16xf32>
    %74 = arith.truncf %73 : vector<8x16xf32> to vector<8x16xbf16>
    %c0_41 = arith.constant 0 : index
    %c0_42 = arith.constant 0 : index
    %75 = vector.load %arg1[%c0_41, %c0_42] : memref<8x1xi32, #tpu.memory_space<vmem>>, vector<8x1xi32>
    %76 = vector.broadcast %75 : vector<8x1xi32> to vector<8x16xi32>
    %77 = arith.cmpi eq, %68, %76 : vector<8x16xi32>
    %78 = arith.extui %77 : vector<8x16xi1> to vector<8x16xi32>
    %79 = arith.sitofp %78 : vector<8x16xi32> to vector<8x16xf32>
    %80 = arith.truncf %79 : vector<8x16xf32> to vector<8x16xbf16>
    %81 = arith.truncf %65 : vector<16x16xf32> to vector<16x16xbf16>
    %cst_43 = arith.constant dense<0.000000e+00> : vector<8x16xf32>
    %82 = tpu.matmul %74, %81, %cst_43 {dimension_numbers = #tpu.dot_dimension_numbers<[1], [0], [0], [1], [0, 0, 1, 1], [], []>} : vector<8x16xbf16>, vector<16x16xbf16>, vector<8x16xf32> -> vector<8x16xf32>
    %cst_44 = arith.constant dense<0.000000e+00> : vector<8x16xf32>
    %83 = tpu.matmul %80, %81, %cst_44 {dimension_numbers = #tpu.dot_dimension_numbers<[1], [0], [0], [1], [0, 0, 1, 1], [], []>} : vector<8x16xbf16>, vector<16x16xbf16>, vector<8x16xf32> -> vector<8x16xf32>
    %c0_45 = arith.constant 0 : index
    %c0_46 = arith.constant 0 : index
    %84 = vector.load %arg7[%c0_45, %c0_46] : memref<32x128xbf16, #tpu.memory_space<vmem>>, vector<16x128xbf16>
    %c16_47 = arith.constant 16 : index
    %c0_48 = arith.constant 0 : index
    %85 = vector.load %arg7[%c16_47, %c0_48] : memref<32x128xbf16, #tpu.memory_space<vmem>>, vector<16x128xbf16>
    %86 = arith.truncf %82 : vector<8x16xf32> to vector<8x16xbf16>
    %cst_49 = arith.constant dense<0.000000e+00> : vector<8x128xf32>
    %87 = tpu.matmul %86, %84, %cst_49 {dimension_numbers = #tpu.dot_dimension_numbers<[1], [0], [0], [1], [0, 0, 1, 1], [], []>} : vector<8x16xbf16>, vector<16x128xbf16>, vector<8x128xf32> -> vector<8x128xf32>
    %88 = arith.truncf %83 : vector<8x16xf32> to vector<8x16xbf16>
    %cst_50 = arith.constant dense<0.000000e+00> : vector<8x128xf32>
    %89 = tpu.matmul %88, %85, %cst_50 {dimension_numbers = #tpu.dot_dimension_numbers<[1], [0], [0], [1], [0, 0, 1, 1], [], []>} : vector<8x16xbf16>, vector<16x128xbf16>, vector<8x128xf32> -> vector<8x128xf32>
    %90 = arith.addf %87, %89 : vector<8x128xf32>
    %91 = vector.broadcast %3 : vector<1x128xf32> to vector<8x128xf32>
    %92 = arith.addf %90, %91 : vector<8x128xf32>
    %cst_51 = arith.constant 0.000000e+00 : f32
    %93 = vector.broadcast %cst_51 : f32 to vector<8x128xf32>
    %94 = arith.maximumf %92, %93 : vector<8x128xf32>
    %95 = arith.truncf %94 : vector<8x128xf32> to vector<8x128xbf16>
    %c0_52 = arith.constant 0 : index
    %c0_53 = arith.constant 0 : index
    %96 = vector.load %arg8[%c0_52, %c0_53] : memref<128x5xbf16, #tpu.memory_space<vmem>>, vector<128x5xbf16>
    %cst_54 = arith.constant dense<0.000000e+00> : vector<8x5xf32>
    %97 = tpu.matmul %95, %96, %cst_54 {dimension_numbers = #tpu.dot_dimension_numbers<[1], [0], [0], [1], [0, 0, 1, 1], [], []>} : vector<8x128xbf16>, vector<128x5xbf16>, vector<8x5xf32> -> vector<8x5xf32>
    %98 = vector.broadcast %4 : vector<1x5xf32> to vector<8x5xf32>
    %99 = arith.addf %97, %98 : vector<8x5xf32>
    %100 = tpu.iota {dimensions = array<i32: 1>} : vector<8x5xi32>
    %c0_i32 = arith.constant 0 : i32
    %101 = vector.broadcast %c0_i32 : i32 to vector<8x5xi32>
    %102 = arith.cmpi eq, %100, %101 : vector<8x5xi32>
    %103 = arith.negf %99 : vector<8x5xf32>
    %104 = math.exp %103 : vector<8x5xf32>
    %cst_55 = arith.constant 1.000000e+00 : f32
    %105 = vector.broadcast %cst_55 : f32 to vector<8x5xf32>
    %106 = arith.addf %105, %104 : vector<8x5xf32>
    %107 = arith.divf %105, %106 : vector<8x5xf32>
    %108 = arith.select %102, %107, %99 : vector<8x5xi1>, vector<8x5xf32>
    %c0_56 = arith.constant 0 : index
    %c0_57 = arith.constant 0 : index
    %109 = vector.load %arg11[%c0_56, %c0_57] : memref<8x5xf32, #tpu.memory_space<vmem>>, vector<8x5xf32>
    tpu.vector_store %arg11[%c0_56, %c0_57], %108 {strides = array<i32>} : memref<8x5xf32, #tpu.memory_space<vmem>>, vector<8x5xf32>,
    return
  }
}

</mosaic_0001>

<llo_original>
// kernel: tpu_custom_call.1
$region0: #{tpu_custom_call.1}
  #allocation0 [shape = 'u32[]', space=smem, size = 0x4, offset = 0x4, fixed_abs, tag = 'smem constant byte address 0x4 - core index']
  #allocation1 [shape = 'u32[144,128]{1,0:T(1,128)}', space=vmem, size = 0x12000, scoped, tag = 'internal scratch']
  %s0 = inlined_call_operand.vmem [shape: s32[8,1], index: 0, kind: input, shape index: {}]
  %s1 = inlined_call_operand.vmem [shape: s32[8,1], index: 1, kind: input, shape index: {}]
  %s2 = inlined_call_operand.vmem [shape: f32[16,8], index: 2, kind: input, shape index: {}]
  %s3 = inlined_call_operand.vmem [shape: bf16[64,16], index: 3, kind: input, shape index: {}]
  %s4 = inlined_call_operand.vmem [shape: f32[16,16], index: 4, kind: input, shape index: {}]
  %s5 = inlined_call_operand.vmem [shape: bf16[40,32], index: 5, kind: input, shape index: {}]
  %s6 = inlined_call_operand.vmem [shape: bf16[160,32], index: 6, kind: input, shape index: {}]
  %s7 = inlined_call_operand.vmem [shape: bf16[32,128], index: 7, kind: input, shape index: {}]
  %s8 = inlined_call_operand.vmem [shape: bf16[128,5], index: 8, kind: input, shape index: {}]
  %s9 = inlined_call_operand.vmem [shape: f32[4,128], index: 9, kind: input, shape index: {}]
  %s10 = inlined_call_operand.hbm [shape: f32[16,48], index: 10, kind: output, shape index: {0}]
  %s11 = inlined_call_operand.hbm [shape: f32[8,5], index: 11, kind: output, shape index: {1}]
  %12 = xla_tuple %s10, %s11
  %s13 = sld [smem:[#allocation0]]
  $region58: #{tpu_custom_call.1} parent=0
    _
  %s15 = ssub.s32 1, %s13
  %s16 = scalar_select 0, %s15, %s13
  $region1: #{tpu_custom_call.1} parent=0
    #allocation2 [shape = 'u8[8192]{0}', space=vmem, size = 0x2000, scoped, tag = 'output window, operand 0, single buffered']
    #allocation3 [shape = 's32[1]{0}', space=sflag, size = 0x4, scoped, tag = 'scoped memory for tpu_custom_call.1']
    #allocation4 [shape = 'u8[4096]{0}', space=vmem, size = 0x1000, scoped, tag = 'output window, operand 1, single buffered']
    #allocation5 [shape = 's32[1]{0}', space=sflag, size = 0x4, scoped, tag = 'scoped memory for tpu_custom_call.1']
    %17 = vsyncpa [#allocation3], 0
    %18 = vsyncpa [#allocation5], 0
    // Predicated region
    $region2: #{tpu_custom_call.1} parent=1 // pred_check
      _
    $region3: #{tpu_custom_call.1} parent=1 // pred_check_branch
      %20 = sbr.rel (0) target = $region5
    $region4: #{tpu_custom_call.1} parent=1 // pred_region
      _
    $region5: #{tpu_custom_call.1} parent=1 // pred_fallthru
      _
    // Predicated region
    $region6: #{tpu_custom_call.1} parent=1 // pred_check
      _
    $region7: #{tpu_custom_call.1} parent=1 // pred_check_branch
      %22 = sbr.rel (0) target = $region9
    $region8: #{tpu_custom_call.1} parent=1 // pred_region
      _
    $region9: #{tpu_custom_call.1} parent=1 // pred_fallthru
      _
    // Predicated region
    $region10: #{tpu_custom_call.1} parent=1 // pred_check
      _
    $region11: #{tpu_custom_call.1} parent=1 // pred_check_branch
      %24 = sbr.rel (0) target = $region13
    $region12: #{tpu_custom_call.1} parent=1 // pred_region
      _
    $region13: #{tpu_custom_call.1} parent=1 // pred_fallthru
      _
    // Predicated region
    $region14: #{tpu_custom_call.1} parent=1 // pred_check
      _
    $region15: #{tpu_custom_call.1} parent=1 // pred_check_branch
      %26 = sbr.rel (0) target = $region17
    $region16: #{tpu_custom_call.1} parent=1 // pred_region
      _
    $region17: #{tpu_custom_call.1} parent=1 // pred_fallthru
      _
    // Predicated region
    $region18: #{tpu_custom_call.1} parent=1 // pred_check
      _
    $region19: #{tpu_custom_call.1} parent=1 // pred_check_branch
      %28 = sbr.rel (0) target = $region21
    $region20: #{tpu_custom_call.1} parent=1 // pred_region
      _
    $region21: #{tpu_custom_call.1} parent=1 // pred_fallthru
      _
    // Predicated region
    $region22: #{tpu_custom_call.1} parent=1 // pred_check
      _
    $region23: #{tpu_custom_call.1} parent=1 // pred_check_branch
      %30 = sbr.rel (0) target = $region25
    $region24: #{tpu_custom_call.1} parent=1 // pred_region
      _
    $region25: #{tpu_custom_call.1} parent=1 // pred_fallthru
      _
    // Predicated region
    $region26: #{tpu_custom_call.1} parent=1 // pred_check
      _
    $region27: #{tpu_custom_call.1} parent=1 // pred_check_branch
      %32 = sbr.rel (0) target = $region29
    $region28: #{tpu_custom_call.1} parent=1 // pred_region
      _
    $region29: #{tpu_custom_call.1} parent=1 // pred_fallthru
      _
    // Predicated region
    $region30: #{tpu_custom_call.1} parent=1 // pred_check
      _
    $region31: #{tpu_custom_call.1} parent=1 // pred_check_branch
      %34 = sbr.rel (0) target = $region33
    $region32: #{tpu_custom_call.1} parent=1 // pred_region
      _
    $region33: #{tpu_custom_call.1} parent=1 // pred_fallthru
      _
    // Predicated region
    $region34: #{tpu_custom_call.1} parent=1 // pred_check
      _
    $region35: #{tpu_custom_call.1} parent=1 // pred_check_branch
      %36 = sbr.rel (0) target = $region37
    $region36: #{tpu_custom_call.1} parent=1 // pred_region
      _
    $region37: #{tpu_custom_call.1} parent=1 // pred_fallthru
      _
    // Predicated region
    $region38: #{tpu_custom_call.1} parent=1 // pred_check
      _
    $region39: #{tpu_custom_call.1} parent=1 // pred_check_branch
      %38 = sbr.rel (0) target = $region41
    $region40: #{tpu_custom_call.1} parent=1 // pred_region
      _
    $region41: #{tpu_custom_call.1} parent=1 // pred_fallthru
      _
    %v40 = vld [vmem:[%s3] sm:$0xf]
    %v41 = vld [vmem:[%s3 + $0x4] sm:$0xf]
    %v42 = vld [vmem:[%s3 + $0x8] sm:$0xf]
    %v43 = vld [vmem:[%s3 + $0xc] sm:$0xf]
    %v44 = vld [vmem:[%s3 + $0x10] sm:$0xf]
    %v45 = vld [vmem:[%s3 + $0x14] sm:$0xf]
    %v46 = vld [vmem:[%s3 + $0x18] sm:$0xf]
    %v47 = vld [vmem:[%s3 + $0x1c] sm:$0xf]
    %v48 = vld [vmem:[%s9] sm:$0x1]
    %v49 = vld [vmem:[%s9 + $0x1] sm:$0x1]
    %v50 = vld [vmem:[%s9 + $0x2] sm:$0x1]
    %v51 = vld [vmem:[%s9 + $0x3] sm:$0x1]
    %v52 = vld [vmem:[%s2] sm:$0xff]
    %v53 = vld [vmem:[%s2 + $0x8] sm:$0xff]
    %v54 = vpack.c.bf16 %v53, %v52
    %v55 = vld [vmem:[%s5] sm:$0xf]
    %v64 = vunpack.c.l.b16 %v40
    %v65 = vunpack.c.l.b16 %v41
    %v66 = vunpack.c.l.b16 %v42
    %v67 = vunpack.c.l.b16 %v43
    %v68 = vunpack.c.l.b16 %v44
    %v69 = vunpack.c.l.b16 %v45
    %v70 = vunpack.c.l.b16 %v46
    %v71 = vunpack.c.l.b16 %v47
    %v72 = vpack.c.b16 %v65, %v64
    %v73 = vpack.c.b16 %v67, %v66
    %v74 = vpack.c.b16 %v69, %v68
    %v75 = vpack.c.b16 %v71, %v70
    %vm76 = vcmask 130048
    %v78 = vsel %vm76, %v72, 0
    %v81 = vsel %vm76, %v73, 0
    %v84 = vsel %vm76, %v74, 0
    %v87 = vsel %vm76, %v75, 0
    %89 = vmatprep.subr.bf16.mxu0 0
    %90 = vmatpush1.bf16.msra.mxu0 %v54
    %91 = vmatprep.subr.bf16.mxu0 0
    %92 = vmatpush1.bf16.msra.mxu0 0
    %93 = vmatprep.subr.bf16.mxu0 0
    %94 = vmatpush1.bf16.msra.mxu0 0
    %95 = vmatprep.subr.bf16.mxu0 0
    %96 = vmatpush1.bf16.msra.mxu0 0
    %97 = vmatprep.subr.bf16.mxu0 0
    %98 = vmatpush1.bf16.msra.mxu0 0
    %99 = vmatprep.subr.bf16.mxu0 0
    %100 = vmatpush1.bf16.msra.mxu0 0
    %101 = vmatprep.subr.bf16.mxu0 0
    %102 = vmatpush1.bf16.msra.mxu0 0
    %103 = vmatprep.subr.bf16.mxu0 0
    %104 = vmatpush1.bf16.msra.mxu0 0
    %105 = vmatprep.subr.bf16.mxu0 0
    %106 = vmatpush1.bf16.msra.mxu0 0
    %107 = vmatprep.subr.bf16.mxu0 0
    %108 = vmatpush1.bf16.msra.mxu0 0
    %109 = vmatprep.subr.bf16.mxu0 0
    %110 = vmatpush1.bf16.msra.mxu0 0
    %111 = vmatprep.subr.bf16.mxu0 0
    %112 = vmatpush1.bf16.msra.mxu0 0
    %113 = vmatprep.subr.bf16.mxu0 0
    %114 = vmatpush1.bf16.msra.mxu0 0
    %115 = vmatprep.subr.bf16.mxu0 0
    %116 = vmatpush1.bf16.msra.mxu0 0
    %117 = vmatprep.subr.bf16.mxu0 0
    %118 = vmatpush1.bf16.msra.mxu0 0
    %119 = vmatprep.subr.bf16.mxu0 0
    %120 = vmatpush1.bf16.msra.mxu0 0
    %121 = vmatprep.mubr.bf16.mxu0 0
    %122 = vmatmul.mubr.bf16.gmra.mrb[0].mxu0 %v78
    %v123 = vpop.f32.mrb[0].mxu0
    %v124 = vadd.f32 0.0, %v123
    %v125 = vpop.f32.mrb[0].mxu0
    %v126 = vpop.f32.mrb[0].mxu0
    %v127 = vadd.f32 0.0, %v126
    %v128 = vpop.f32.mrb[0].mxu0
    %129 = vmatprep.mubr.bf16.mxu0 0
    %130 = vmatmul.mubr.bf16.gmra.mrb[0].mxu0 %v81
    %v131 = vpop.f32.mrb[0].mxu0
    %v132 = vadd.f32 0.0, %v131
    %v133 = vpop.f32.mrb[0].mxu0
    %v134 = vpop.f32.mrb[0].mxu0
    %v135 = vadd.f32 0.0, %v134
    %v136 = vpop.f32.mrb[0].mxu0
    %137 = vmatprep.mubr.bf16.mxu0 0
    %138 = vmatmul.mubr.bf16.gmra.mrb[0].mxu0 %v84
    %v139 = vpop.f32.mrb[0].mxu0
    %v140 = vadd.f32 0.0, %v139
    %v141 = vpop.f32.mrb[0].mxu0
    %v142 = vpop.f32.mrb[0].mxu0
    %v143 = vadd.f32 0.0, %v142
    %v144 = vpop.f32.mrb[0].mxu0
    %145 = vmatprep.mubr.bf16.mxu0 0
    %146 = vmatmul.mubr.bf16.gmra.mrb[0].mxu0 %v87
    %v147 = vpop.f32.mrb[0].mxu0
    %v148 = vadd.f32 0.0, %v147
    %v149 = vpop.f32.mrb[0].mxu0
    %v150 = vpop.f32.mrb[0].mxu0
    %v151 = vadd.f32 0.0, %v150
    %v152 = vpop.f32.mrb[0].mxu0
    %153 = vdwg.mxu0
    %v154 = vld [vmem:[%s5 + $0x4] sm:$0xf]
    %v155 = vpack.c.bf16 %v127, %v124
    %vm156 = vcmask 64512
    %v158 = vsel %vm156, %v155, 0
    %vm160 = vcmask 1043456
    %v162 = vsel %vm160, %v154, 0
    %164 = vmatprep.subr.bf16.mxu0 0
    %165 = vmatpush1.bf16.msra.mxu0 %v162
    %166 = vmatprep.subr.bf16.mxu0 0
    %167 = vmatpush1.bf16.msra.mxu0 0
    %168 = vmatprep.subr.bf16.mxu0 0
    %169 = vmatpush1.bf16.msra.mxu0 0
    %170 = vmatprep.subr.bf16.mxu0 0
    %171 = vmatpush1.bf16.msra.mxu0 0
    %172 = vmatprep.subr.bf16.mxu0 0
    %173 = vmatpush1.bf16.msra.mxu0 0
    %174 = vmatprep.subr.bf16.mxu0 0
    %175 = vmatpush1.bf16.msra.mxu0 0
    %176 = vmatprep.subr.bf16.mxu0 0
    %177 = vmatpush1.bf16.msra.mxu0 0
    %178 = vmatprep.subr.bf16.mxu0 0
    %179 = vmatpush1.bf16.msra.mxu0 0
    %180 = vmatprep.subr.bf16.mxu0 0
    %181 = vmatpush1.bf16.msra.mxu0 0
    %182 = vmatprep.subr.bf16.mxu0 0
    %183 = vmatpush1.bf16.msra.mxu0 0
    %184 = vmatprep.subr.bf16.mxu0 0
    %185 = vmatpush1.bf16.msra.mxu0 0
    %186 = vmatprep.subr.bf16.mxu0 0
    %187 = vmatpush1.bf16.msra.mxu0 0
    %188 = vmatprep.subr.bf16.mxu0 0
    %189 = vmatpush1.bf16.msra.mxu0 0
    %190 = vmatprep.subr.bf16.mxu0 0
    %191 = vmatpush1.bf16.msra.mxu0 0
    %192 = vmatprep.subr.bf16.mxu0 0
    %193 = vmatpush1.bf16.msra.mxu0 0
    %194 = vmatprep.subr.bf16.mxu0 0
    %195 = vmatpush1.bf16.msra.mxu0 0
    %196 = vmatprep.mubr.bf16.mxu0 0
    %197 = vmatmul.mubr.bf16.gmra.mrb[0].mxu0 %v158
    %v198 = vpop.f32.mrb[0].mxu0
    %v199 = vadd.f32 0.0, %v198
    %v200 = vpop.f32.mrb[0].mxu0
    %v201 = vpop.f32.mrb[0].mxu0
    %v202 = vadd.f32 0.0, %v201
    %v203 = vpop.f32.mrb[0].mxu0
    %204 = vdwg.mxu0
    %v206 = vsel %vm156, %v54, 0
    %v209 = vsel %vm160, %v55, 0
    %211 = vmatprep.subr.bf16.mxu0 0
    %212 = vmatpush1.bf16.msra.mxu0 %v209
    %213 = vmatprep.subr.bf16.mxu0 0
    %214 = vmatpush1.bf16.msra.mxu0 0
    %215 = vmatprep.subr.bf16.mxu0 0
    %216 = vmatpush1.bf16.msra.mxu0 0
    %217 = vmatprep.subr.bf16.mxu0 0
    %218 = vmatpush1.bf16.msra.mxu0 0
    %219 = vmatprep.subr.bf16.mxu0 0
    %220 = vmatpush1.bf16.msra.mxu0 0
    %221 = vmatprep.subr.bf16.mxu0 0
    %222 = vmatpush1.bf16.msra.mxu0 0
    %223 = vmatprep.subr.bf16.mxu0 0
    %224 = vmatpush1.bf16.msra.mxu0 0
    %225 = vmatprep.subr.bf16.mxu0 0
    %226 = vmatpush1.bf16.msra.mxu0 0
    %227 = vmatprep.subr.bf16.mxu0 0
    %228 = vmatpush1.bf16.msra.mxu0 0
    %229 = vmatprep.subr.bf16.mxu0 0
    %230 = vmatpush1.bf16.msra.mxu0 0
    %231 = vmatprep.subr.bf16.mxu0 0
    %232 = vmatpush1.bf16.msra.mxu0 0
    %233 = vmatprep.subr.bf16.mxu0 0
    %234 = vmatpush1.bf16.msra.mxu0 0
    %235 = vmatprep.subr.bf16.mxu0 0
    %236 = vmatpush1.bf16.msra.mxu0 0
    %237 = vmatprep.subr.bf16.mxu0 0
    %238 = vmatpush1.bf16.msra.mxu0 0
    %239 = vmatprep.subr.bf16.mxu0 0
    %240 = vmatpush1.bf16.msra.mxu0 0
    %241 = vmatprep.subr.bf16.mxu0 0
    %242 = vmatpush1.bf16.msra.mxu0 0
    %243 = vmatprep.mubr.bf16.mxu0 0
    %244 = vmatmul.mubr.bf16.gmra.mrb[0].mxu0 %v206
    %v245 = vpop.f32.mrb[0].mxu0
    %v246 = vadd.f32 %v199, %v245
    %v247 = vpop.f32.mrb[0].mxu0
    %v248 = vpop.f32.mrb[0].mxu0
    %v249 = vadd.f32 %v202, %v248
    %v250 = vpop.f32.mrb[0].mxu0
    %251 = vdwg.mxu0
    %v252 = vld [vmem:[%s5 + $0x8] sm:$0xf]
    %v253 = vpack.c.bf16 %v135, %v132
    %v255 = vsel %vm156, %v253, 0
    %v258 = vsel %vm160, %v252, 0
    %260 = vmatprep.subr.bf16.mxu0 0
    %261 = vmatpush1.bf16.msra.mxu0 %v258
    %262 = vmatprep.subr.bf16.mxu0 0
    %263 = vmatpush1.bf16.msra.mxu0 0
    %264 = vmatprep.subr.bf16.mxu0 0
    %265 = vmatpush1.bf16.msra.mxu0 0
    %266 = vmatprep.subr.bf16.mxu0 0
    %267 = vmatpush1.bf16.msra.mxu0 0
    %268 = vmatprep.subr.bf16.mxu0 0
    %269 = vmatpush1.bf16.msra.mxu0 0
    %270 = vmatprep.subr.bf16.mxu0 0
    %271 = vmatpush1.bf16.msra.mxu0 0
    %272 = vmatprep.subr.bf16.mxu0 0
    %273 = vmatpush1.bf16.msra.mxu0 0
    %274 = vmatprep.subr.bf16.mxu0 0
    %275 = vmatpush1.bf16.msra.mxu0 0
    %276 = vmatprep.subr.bf16.mxu0 0
    %277 = vmatpush1.bf16.msra.mxu0 0
    %278 = vmatprep.subr.bf16.mxu0 0
    %279 = vmatpush1.bf16.msra.mxu0 0
    %280 = vmatprep.subr.bf16.mxu0 0
    %281 = vmatpush1.bf16.msra.mxu0 0
    %282 = vmatprep.subr.bf16.mxu0 0
    %283 = vmatpush1.bf16.msra.mxu0 0
    %284 = vmatprep.subr.bf16.mxu0 0
    %285 = vmatpush1.bf16.msra.mxu0 0
    %286 = vmatprep.subr.bf16.mxu0 0
    %287 = vmatpush1.bf16.msra.mxu0 0
    %288 = vmatprep.subr.bf16.mxu0 0
    %289 = vmatpush1.bf16.msra.mxu0 0
    %290 = vmatprep.subr.bf16.mxu0 0
    %291 = vmatpush1.bf16.msra.mxu0 0
    %292 = vmatprep.mubr.bf16.mxu0 0
    %293 = vmatmul.mubr.bf16.gmra.mrb[0].mxu0 %v255
    %v294 = vpop.f32.mrb[0].mxu0
    %v295 = vadd.f32 0.0, %v294
    %v296 = vpop.f32.mrb[0].mxu0
    %v297 = vpop.f32.mrb[0].mxu0
    %v298 = vadd.f32 0.0, %v297
    %v299 = vpop.f32.mrb[0].mxu0
    %300 = vdwg.mxu0
    %v301 = vadd.f32 %v246, %v295
    %v302 = vadd.f32 %v249, %v298
    %v303 = vld [vmem:[%s5 + $0xc] sm:$0xf]
    %v304 = vpack.c.bf16 %v143, %v140
    %v306 = vsel %vm156, %v304, 0
    %v309 = vsel %vm160, %v303, 0
    %311 = vmatprep.subr.bf16.mxu0 0
    %312 = vmatpush1.bf16.msra.mxu0 %v309
    %313 = vmatprep.subr.bf16.mxu0 0
    %314 = vmatpush1.bf16.msra.mxu0 0
    %315 = vmatprep.subr.bf16.mxu0 0
    %316 = vmatpush1.bf16.msra.mxu0 0
    %317 = vmatprep.subr.bf16.mxu0 0
    %318 = vmatpush1.bf16.msra.mxu0 0
    %319 = vmatprep.subr.bf16.mxu0 0
    %320 = vmatpush1.bf16.msra.mxu0 0
    %321 = vmatprep.subr.bf16.mxu0 0
    %322 = vmatpush1.bf16.msra.mxu0 0
    %323 = vmatprep.subr.bf16.mxu0 0
    %324 = vmatpush1.bf16.msra.mxu0 0
    %325 = vmatprep.subr.bf16.mxu0 0
    %326 = vmatpush1.bf16.msra.mxu0 0
    %327 = vmatprep.subr.bf16.mxu0 0
    %328 = vmatpush1.bf16.msra.mxu0 0
    %329 = vmatprep.subr.bf16.mxu0 0
    %330 = vmatpush1.bf16.msra.mxu0 0
    %331 = vmatprep.subr.bf16.mxu0 0
    %332 = vmatpush1.bf16.msra.mxu0 0
    %333 = vmatprep.subr.bf16.mxu0 0
    %334 = vmatpush1.bf16.msra.mxu0 0
    %335 = vmatprep.subr.bf16.mxu0 0
    %336 = vmatpush1.bf16.msra.mxu0 0
    %337 = vmatprep.subr.bf16.mxu0 0
    %338 = vmatpush1.bf16.msra.mxu0 0
    %339 = vmatprep.subr.bf16.mxu0 0
    %340 = vmatpush1.bf16.msra.mxu0 0
    %341 = vmatprep.subr.bf16.mxu0 0
    %342 = vmatpush1.bf16.msra.mxu0 0
    %343 = vmatprep.mubr.bf16.mxu0 0
    %344 = vmatmul.mubr.bf16.gmra.mrb[0].mxu0 %v306
    %v345 = vpop.f32.mrb[0].mxu0
    %v346 = vadd.f32 0.0, %v345
    %v347 = vpop.f32.mrb[0].mxu0
    %v348 = vpop.f32.mrb[0].mxu0
    %v349 = vadd.f32 0.0, %v348
    %v350 = vpop.f32.mrb[0].mxu0
    %351 = vdwg.mxu0
    %v352 = vadd.f32 %v301, %v346
    %v353 = vadd.f32 %v302, %v349
    %v354 = vld [vmem:[%s5 + $0x10] sm:$0xf]
    %v355 = vpack.c.bf16 %v151, %v148
    %v357 = vsel %vm156, %v355, 0
    %v360 = vsel %vm160, %v354, 0
    %362 = vmatprep.subr.bf16.mxu0 0
    %363 = vmatpush1.bf16.msra.mxu0 %v360
    %364 = vmatprep.subr.bf16.mxu0 0
    %365 = vmatpush1.bf16.msra.mxu0 0
    %366 = vmatprep.subr.bf16.mxu0 0
    %367 = vmatpush1.bf16.msra.mxu0 0
    %368 = vmatprep.subr.bf16.mxu0 0
    %369 = vmatpush1.bf16.msra.mxu0 0
    %370 = vmatprep.subr.bf16.mxu0 0
    %371 = vmatpush1.bf16.msra.mxu0 0
    %372 = vmatprep.subr.bf16.mxu0 0
    %373 = vmatpush1.bf16.msra.mxu0 0
    %374 = vmatprep.subr.bf16.mxu0 0
    %375 = vmatpush1.bf16.msra.mxu0 0
    %376 = vmatprep.subr.bf16.mxu0 0
    %377 = vmatpush1.bf16.msra.mxu0 0
    %378 = vmatprep.subr.bf16.mxu0 0
    %379 = vmatpush1.bf16.msra.mxu0 0
    %380 = vmatprep.subr.bf16.mxu0 0
    %381 = vmatpush1.bf16.msra.mxu0 0
    %382 = vmatprep.subr.bf16.mxu0 0
    %383 = vmatpush1.bf16.msra.mxu0 0
    %384 = vmatprep.subr.bf16.mxu0 0
    %385 = vmatpush1.bf16.msra.mxu0 0
    %386 = vmatprep.subr.bf16.mxu0 0
    %387 = vmatpush1.bf16.msra.mxu0 0
    %388 = vmatprep.subr.bf16.mxu0 0
    %389 = vmatpush1.bf16.msra.mxu0 0
    %390 = vmatprep.subr.bf16.mxu0 0
    %391 = vmatpush1.bf16.msra.mxu0 0
    %392 = vmatprep.subr.bf16.mxu0 0
    %393 = vmatpush1.bf16.msra.mxu0 0
    %394 = vmatprep.mubr.bf16.mxu0 0
    %395 = vmatmul.mubr.bf16.gmra.mrb[0].mxu0 %v357
    %v396 = vpop.f32.mrb[0].mxu0
    %v397 = vadd.f32 0.0, %v396
    %v398 = vpop.f32.mrb[0].mxu0
    %v399 = vpop.f32.mrb[0].mxu0
    %v400 = vadd.f32 0.0, %v399
    %v401 = vpop.f32.mrb[0].mxu0
    %402 = vdwg.mxu0
    %v403 = vadd.f32 %v352, %v397
    %v404 = vadd.f32 %v353, %v400
    %v405 = vlaneseq
    %v406 = vshrl.u32 %v405, 7
    %v407 = vsub.s32 0, %v406
    %v408 = vrot.slane %v48, %v407
    %v409 = vadd.f32 %v403, %v408
    %v410 = vadd.f32 %v404, %v408
    %v411 = vmax.f32 %v409, 0.0
    %v412 = vmax.f32 %v410, 0.0
    %v413 = vpack.c.bf16 %v412, %v411
    %v414 = vld [vmem:[%s6] sm:$0xf]
    %v415 = vld [vmem:[%s6 + $0x4] sm:$0xf]
    %v416 = vld [vmem:[%s6 + $0x8] sm:$0xf]
    %v417 = vld [vmem:[%s6 + $0xc] sm:$0xf]
    %418 = vmatprep.subr.bf16.mxu0 0
    %419 = vmatpush1.bf16.msra.mxu0 %v413
    %420 = vmatprep.subr.bf16.mxu0 0
    %421 = vmatpush1.bf16.msra.mxu0 0
    %422 = vmatprep.subr.bf16.mxu0 0
    %423 = vmatpush1.bf16.msra.mxu0 0
    %424 = vmatprep.subr.bf16.mxu0 0
    %425 = vmatpush1.bf16.msra.mxu0 0
    %426 = vmatprep.subr.bf16.mxu0 0
    %427 = vmatpush1.bf16.msra.mxu0 0
    %428 = vmatprep.subr.bf16.mxu0 0
    %429 = vmatpush1.bf16.msra.mxu0 0
    %430 = vmatprep.subr.bf16.mxu0 0
    %431 = vmatpush1.bf16.msra.mxu0 0
    %432 = vmatprep.subr.bf16.mxu0 0
    %433 = vmatpush1.bf16.msra.mxu0 0
    %434 = vmatprep.subr.bf16.mxu0 0
    %435 = vmatpush1.bf16.msra.mxu0 0
    %436 = vmatprep.subr.bf16.mxu0 0
    %437 = vmatpush1.bf16.msra.mxu0 0
    %438 = vmatprep.subr.bf16.mxu0 0
    %439 = vmatpush1.bf16.msra.mxu0 0
    %440 = vmatprep.subr.bf16.mxu0 0
    %441 = vmatpush1.bf16.msra.mxu0 0
    %442 = vmatprep.subr.bf16.mxu0 0
    %443 = vmatpush1.bf16.msra.mxu0 0
    %444 = vmatprep.subr.bf16.mxu0 0
    %445 = vmatpush1.bf16.msra.mxu0 0
    %446 = vmatprep.subr.bf16.mxu0 0
    %447 = vmatpush1.bf16.msra.mxu0 0
    %448 = vmatprep.subr.bf16.mxu0 0
    %449 = vmatpush1.bf16.msra.mxu0 0
    %450 = vmatprep.mubr.bf16.mxu0 0
    %451 = vmatmul.mubr.bf16.gmra.mrb[0].mxu0 %v78
    %v452 = vpop.f32.mrb[0].mxu0
    %v453 = vadd.f32 0.0, %v452
    %v454 = vpop.f32.mrb[0].mxu0
    %v455 = vpop.f32.mrb[0].mxu0
    %v456 = vadd.f32 0.0, %v455
    %v457 = vpop.f32.mrb[0].mxu0
    %458 = vmatprep.mubr.bf16.mxu0 0
    %459 = vmatmul.mubr.bf16.gmra.mrb[0].mxu0 %v81
    %v460 = vpop.f32.mrb[0].mxu0
    %v461 = vadd.f32 0.0, %v460
    %v462 = vpop.f32.mrb[0].mxu0
    %v463 = vpop.f32.mrb[0].mxu0
    %v464 = vadd.f32 0.0, %v463
    %v465 = vpop.f32.mrb[0].mxu0
    %466 = vmatprep.mubr.bf16.mxu0 0
    %467 = vmatmul.mubr.bf16.gmra.mrb[0].mxu0 %v84
    %v468 = vpop.f32.mrb[0].mxu0
    %v469 = vadd.f32 0.0, %v468
    %v470 = vpop.f32.mrb[0].mxu0
    %v471 = vpop.f32.mrb[0].mxu0
    %v472 = vadd.f32 0.0, %v471
    %v473 = vpop.f32.mrb[0].mxu0
    %474 = vmatprep.mubr.bf16.mxu0 0
    %475 = vmatmul.mubr.bf16.gmra.mrb[0].mxu0 %v87
    %v476 = vpop.f32.mrb[0].mxu0
    %v477 = vadd.f32 0.0, %v476
    %v478 = vpop.f32.mrb[0].mxu0
    %v479 = vpop.f32.mrb[0].mxu0
    %v480 = vadd.f32 0.0, %v479
    %v481 = vpop.f32.mrb[0].mxu0
    %482 = vdwg.mxu0
    %v483 = vld [vmem:[%s6 + $0x10] sm:$0xf]
    %v484 = vld [vmem:[%s6 + $0x14] sm:$0xf]
    %v485 = vld [vmem:[%s6 + $0x18] sm:$0xf]
    %v486 = vld [vmem:[%s6 + $0x1c] sm:$0xf]
    %v487 = vpack.c.bf16 %v456, %v453
    %v492 = vunpack.c.l.b16 %v483
    %v493 = vunpack.c.l.b16 %v484
    %v494 = vunpack.c.l.b16 %v485
    %v495 = vunpack.c.l.b16 %v486
    %v496 = vpack.c.b16 %v493, %v492
    %v497 = vpack.c.b16 %v495, %v494
    %vm500 = vcmask 261120
    %v502 = vsel %vm500, %v487, 0
    %504 = vmatprep.subr.bf16.mxu0 0
    %505 = vmatpush1.bf16.msra.mxu0 %v496
    %506 = vmatprep.subr.bf16.mxu0 0
    %507 = vmatpush1.bf16.msra.mxu0 %v497
    %508 = vmatprep.subr.bf16.mxu0 0
    %509 = vmatpush1.bf16.msra.mxu0 0
    %510 = vmatprep.subr.bf16.mxu0 0
    %511 = vmatpush1.bf16.msra.mxu0 0
    %512 = vmatprep.subr.bf16.mxu0 0
    %513 = vmatpush1.bf16.msra.mxu0 0
    %514 = vmatprep.subr.bf16.mxu0 0
    %515 = vmatpush1.bf16.msra.mxu0 0
    %516 = vmatprep.subr.bf16.mxu0 0
    %517 = vmatpush1.bf16.msra.mxu0 0
    %518 = vmatprep.subr.bf16.mxu0 0
    %519 = vmatpush1.bf16.msra.mxu0 0
    %520 = vmatprep.subr.bf16.mxu0 0
    %521 = vmatpush1.bf16.msra.mxu0 0
    %522 = vmatprep.subr.bf16.mxu0 0
    %523 = vmatpush1.bf16.msra.mxu0 0
    %524 = vmatprep.subr.bf16.mxu0 0
    %525 = vmatpush1.bf16.msra.mxu0 0
    %526 = vmatprep.subr.bf16.mxu0 0
    %527 = vmatpush1.bf16.msra.mxu0 0
    %528 = vmatprep.subr.bf16.mxu0 0
    %529 = vmatpush1.bf16.msra.mxu0 0
    %530 = vmatprep.subr.bf16.mxu0 0
    %531 = vmatpush1.bf16.msra.mxu0 0
    %532 = vmatprep.subr.bf16.mxu0 0
    %533 = vmatpush1.bf16.msra.mxu0 0
    %534 = vmatprep.subr.bf16.mxu0 0
    %535 = vmatpush1.bf16.msra.mxu0 0
    %536 = vmatprep.mubr.bf16.mxu0 0
    %537 = vmatmul.mubr.bf16.gmra.mrb[0].mxu0 %v502
    %v538 = vpop.f32.mrb[0].mxu0
    %v539 = vadd.f32 0.0, %v538
    %v540 = vpop.f32.mrb[0].mxu0
    %v541 = vpop.f32.mrb[0].mxu0
    %v542 = vadd.f32 0.0, %v541
    %v543 = vpop.f32.mrb[0].mxu0
    %544 = vdwg.mxu0
    %v549 = vunpack.c.l.b16 %v414
    %v550 = vunpack.c.l.b16 %v415
    %v551 = vunpack.c.l.b16 %v416
    %v552 = vunpack.c.l.b16 %v417
    %v553 = vpack.c.b16 %v550, %v549
    %v554 = vpack.c.b16 %v552, %v551
    %v558 = vsel %vm500, %v413, 0
    %560 = vmatprep.subr.bf16.mxu0 0
    %561 = vmatpush1.bf16.msra.mxu0 %v553
    %562 = vmatprep.subr.bf16.mxu0 0
    %563 = vmatpush1.bf16.msra.mxu0 %v554
    %564 = vmatprep.subr.bf16.mxu0 0
    %565 = vmatpush1.bf16.msra.mxu0 0
    %566 = vmatprep.subr.bf16.mxu0 0
    %567 = vmatpush1.bf16.msra.mxu0 0
    %568 = vmatprep.subr.bf16.mxu0 0
    %569 = vmatpush1.bf16.msra.mxu0 0
    %570 = vmatprep.subr.bf16.mxu0 0
    %571 = vmatpush1.bf16.msra.mxu0 0
    %572 = vmatprep.subr.bf16.mxu0 0
    %573 = vmatpush1.bf16.msra.mxu0 0
    %574 = vmatprep.subr.bf16.mxu0 0
    %575 = vmatpush1.bf16.msra.mxu0 0
    %576 = vmatprep.subr.bf16.mxu0 0
    %577 = vmatpush1.bf16.msra.mxu0 0
    %578 = vmatprep.subr.bf16.mxu0 0
    %579 = vmatpush1.bf16.msra.mxu0 0
    %580 = vmatprep.subr.bf16.mxu0 0
    %581 = vmatpush1.bf16.msra.mxu0 0
    %582 = vmatprep.subr.bf16.mxu0 0
    %583 = vmatpush1.bf16.msra.mxu0 0
    %584 = vmatprep.subr.bf16.mxu0 0
    %585 = vmatpush1.bf16.msra.mxu0 0
    %586 = vmatprep.subr.bf16.mxu0 0
    %587 = vmatpush1.bf16.msra.mxu0 0
    %588 = vmatprep.subr.bf16.mxu0 0
    %589 = vmatpush1.bf16.msra.mxu0 0
    %590 = vmatprep.subr.bf16.mxu0 0
    %591 = vmatpush1.bf16.msra.mxu0 0
    %592 = vmatprep.mubr.bf16.mxu0 0
    %593 = vmatmul.mubr.bf16.gmra.mrb[0].mxu0 %v558
    %v594 = vpop.f32.mrb[0].mxu0
    %v595 = vadd.f32 %v539, %v594
    %v596 = vpop.f32.mrb[0].mxu0
    %v597 = vpop.f32.mrb[0].mxu0
    %v598 = vadd.f32 %v542, %v597
    %v599 = vpop.f32.mrb[0].mxu0
    %600 = vdwg.mxu0
    %v601 = vld [vmem:[%s6 + $0x20] sm:$0xf]
    %v602 = vld [vmem:[%s6 + $0x24] sm:$0xf]
    %v603 = vld [vmem:[%s6 + $0x28] sm:$0xf]
    %v604 = vld [vmem:[%s6 + $0x2c] sm:$0xf]
    %v605 = vpack.c.bf16 %v464, %v461
    %v610 = vunpack.c.l.b16 %v601
    %v611 = vunpack.c.l.b16 %v602
    %v612 = vunpack.c.l.b16 %v603
    %v613 = vunpack.c.l.b16 %v604
    %v614 = vpack.c.b16 %v611, %v610
    %v615 = vpack.c.b16 %v613, %v612
    %v619 = vsel %vm500, %v605, 0
    %621 = vmatprep.subr.bf16.mxu0 0
    %622 = vmatpush1.bf16.msra.mxu0 %v614
    %623 = vmatprep.subr.bf16.mxu0 0
    %624 = vmatpush1.bf16.msra.mxu0 %v615
    %625 = vmatprep.subr.bf16.mxu0 0
    %626 = vmatpush1.bf16.msra.mxu0 0
    %627 = vmatprep.subr.bf16.mxu0 0
    %628 = vmatpush1.bf16.msra.mxu0 0
    %629 = vmatprep.subr.bf16.mxu0 0
    %630 = vmatpush1.bf16.msra.mxu0 0
    %631 = vmatprep.subr.bf16.mxu0 0
    %632 = vmatpush1.bf16.msra.mxu0 0
    %633 = vmatprep.subr.bf16.mxu0 0
    %634 = vmatpush1.bf16.msra.mxu0 0
    %635 = vmatprep.subr.bf16.mxu0 0
    %636 = vmatpush1.bf16.msra.mxu0 0
    %637 = vmatprep.subr.bf16.mxu0 0
    %638 = vmatpush1.bf16.msra.mxu0 0
    %639 = vmatprep.subr.bf16.mxu0 0
    %640 = vmatpush1.bf16.msra.mxu0 0
    %641 = vmatprep.subr.bf16.mxu0 0
    %642 = vmatpush1.bf16.msra.mxu0 0
    %643 = vmatprep.subr.bf16.mxu0 0
    %644 = vmatpush1.bf16.msra.mxu0 0
    %645 = vmatprep.subr.bf16.mxu0 0
    %646 = vmatpush1.bf16.msra.mxu0 0
    %647 = vmatprep.subr.bf16.mxu0 0
    %648 = vmatpush1.bf16.msra.mxu0 0
    %649 = vmatprep.subr.bf16.mxu0 0
    %650 = vmatpush1.bf16.msra.mxu0 0
    %651 = vmatprep.subr.bf16.mxu0 0
    %652 = vmatpush1.bf16.msra.mxu0 0
    %653 = vmatprep.mubr.bf16.mxu0 0
    %654 = vmatmul.mubr.bf16.gmra.mrb[0].mxu0 %v619
    %v655 = vpop.f32.mrb[0].mxu0
    %v656 = vadd.f32 0.0, %v655
    %v657 = vpop.f32.mrb[0].mxu0
    %v658 = vpop.f32.mrb[0].mxu0
    %v659 = vadd.f32 0.0, %v658
    %v660 = vpop.f32.mrb[0].mxu0
    %661 = vdwg.mxu0
    %v662 = vadd.f32 %v595, %v656
    %v663 = vadd.f32 %v598, %v659
    %v664 = vld [vmem:[%s6 + $0x30] sm:$0xf]
    %v665 = vld [vmem:[%s6 + $0x34] sm:$0xf]
    %v666 = vld [vmem:[%s6 + $0x38] sm:$0xf]
    %v667 = vld [vmem:[%s6 + $0x3c] sm:$0xf]
    %v668 = vpack.c.bf16 %v472, %v469
    %v673 = vunpack.c.l.b16 %v664
    %v674 = vunpack.c.l.b16 %v665
    %v675 = vunpack.c.l.b16 %v666
    %v676 = vunpack.c.l.b16 %v667
    %v677 = vpack.c.b16 %v674, %v673
    %v678 = vpack.c.b16 %v676, %v675
    %v682 = vsel %vm500, %v668, 0
    %684 = vmatprep.subr.bf16.mxu0 0
    %685 = vmatpush1.bf16.msra.mxu0 %v677
    %686 = vmatprep.subr.bf16.mxu0 0
    %687 = vmatpush1.bf16.msra.mxu0 %v678
    %688 = vmatprep.subr.bf16.mxu0 0
    %689 = vmatpush1.bf16.msra.mxu0 0
    %690 = vmatprep.subr.bf16.mxu0 0
    %691 = vmatpush1.bf16.msra.mxu0 0
    %692 = vmatprep.subr.bf16.mxu0 0
    %693 = vmatpush1.bf16.msra.mxu0 0
    %694 = vmatprep.subr.bf16.mxu0 0
    %695 = vmatpush1.bf16.msra.mxu0 0
    %696 = vmatprep.subr.bf16.mxu0 0
    %697 = vmatpush1.bf16.msra.mxu0 0
    %698 = vmatprep.subr.bf16.mxu0 0
    %699 = vmatpush1.bf16.msra.mxu0 0
    %700 = vmatprep.subr.bf16.mxu0 0
    %701 = vmatpush1.bf16.msra.mxu0 0
    %702 = vmatprep.subr.bf16.mxu0 0
    %703 = vmatpush1.bf16.msra.mxu0 0
    %704 = vmatprep.subr.bf16.mxu0 0
    %705 = vmatpush1.bf16.msra.mxu0 0
    %706 = vmatprep.subr.bf16.mxu0 0
    %707 = vmatpush1.bf16.msra.mxu0 0
    %708 = vmatprep.subr.bf16.mxu0 0
    %709 = vmatpush1.bf16.msra.mxu0 0
    %710 = vmatprep.subr.bf16.mxu0 0
    %711 = vmatpush1.bf16.msra.mxu0 0
    %712 = vmatprep.subr.bf16.mxu0 0
    %713 = vmatpush1.bf16.msra.mxu0 0
    %714 = vmatprep.subr.bf16.mxu0 0
    %715 = vmatpush1.bf16.msra.mxu0 0
    %716 = vmatprep.mubr.bf16.mxu0 0
    %717 = vmatmul.mubr.bf16.gmra.mrb[0].mxu0 %v682
    %v718 = vpop.f32.mrb[0].mxu0
    %v719 = vadd.f32 0.0, %v718
    %v720 = vpop.f32.mrb[0].mxu0
    %v721 = vpop.f32.mrb[0].mxu0
    %v722 = vadd.f32 0.0, %v721
    %v723 = vpop.f32.mrb[0].mxu0
    %724 = vdwg.mxu0
    %v725 = vadd.f32 %v662, %v719
    %v726 = vadd.f32 %v663, %v722
    %v727 = vld [vmem:[%s6 + $0x40] sm:$0xf]
    %v728 = vld [vmem:[%s6 + $0x44] sm:$0xf]
    %v729 = vld [vmem:[%s6 + $0x48] sm:$0xf]
    %v730 = vld [vmem:[%s6 + $0x4c] sm:$0xf]
    %v731 = vpack.c.bf16 %v480, %v477
    %v736 = vunpack.c.l.b16 %v727
    %v737 = vunpack.c.l.b16 %v728
    %v738 = vunpack.c.l.b16 %v729
    %v739 = vunpack.c.l.b16 %v730
    %v740 = vpack.c.b16 %v737, %v736
    %v741 = vpack.c.b16 %v739, %v738
    %v745 = vsel %vm500, %v731, 0
    %747 = vmatprep.subr.bf16.mxu0 0
    %748 = vmatpush1.bf16.msra.mxu0 %v740
    %749 = vmatprep.subr.bf16.mxu0 0
    %750 = vmatpush1.bf16.msra.mxu0 %v741
    %751 = vmatprep.subr.bf16.mxu0 0
    %752 = vmatpush1.bf16.msra.mxu0 0
    %753 = vmatprep.subr.bf16.mxu0 0
    %754 = vmatpush1.bf16.msra.mxu0 0
    %755 = vmatprep.subr.bf16.mxu0 0
    %756 = vmatpush1.bf16.msra.mxu0 0
    %757 = vmatprep.subr.bf16.mxu0 0
    %758 = vmatpush1.bf16.msra.mxu0 0
    %759 = vmatprep.subr.bf16.mxu0 0
    %760 = vmatpush1.bf16.msra.mxu0 0
    %761 = vmatprep.subr.bf16.mxu0 0
    %762 = vmatpush1.bf16.msra.mxu0 0
    %763 = vmatprep.subr.bf16.mxu0 0
    %764 = vmatpush1.bf16.msra.mxu0 0
    %765 = vmatprep.subr.bf16.mxu0 0
    %766 = vmatpush1.bf16.msra.mxu0 0
    %767 = vmatprep.subr.bf16.mxu0 0
    %768 = vmatpush1.bf16.msra.mxu0 0
    %769 = vmatprep.subr.bf16.mxu0 0
    %770 = vmatpush1.bf16.msra.mxu0 0
    %771 = vmatprep.subr.bf16.mxu0 0
    %772 = vmatpush1.bf16.msra.mxu0 0
    %773 = vmatprep.subr.bf16.mxu0 0
    %774 = vmatpush1.bf16.msra.mxu0 0
    %775 = vmatprep.subr.bf16.mxu0 0
    %776 = vmatpush1.bf16.msra.mxu0 0
    %777 = vmatprep.subr.bf16.mxu0 0
    %778 = vmatpush1.bf16.msra.mxu0 0
    %779 = vmatprep.mubr.bf16.mxu0 0
    %780 = vmatmul.mubr.bf16.gmra.mrb[0].mxu0 %v745
    %v781 = vpop.f32.mrb[0].mxu0
    %v782 = vadd.f32 0.0, %v781
    %v783 = vpop.f32.mrb[0].mxu0
    %v784 = vpop.f32.mrb[0].mxu0
    %v785 = vadd.f32 0.0, %v784
    %v786 = vpop.f32.mrb[0].mxu0
    %787 = vdwg.mxu0
    %v788 = vadd.f32 %v725, %v782
    %v789 = vadd.f32 %v726, %v785
    %v790 = vlaneseq
    %v791 = vshrl.u32 %v790, 7
    %v792 = vsub.s32 0, %v791
    %v793 = vrot.slane %v49, %v792
    %v794 = vadd.f32 %v788, %v793
    %v795 = vadd.f32 %v789, %v793
    %v796 = vmul.f32 %v794, 1.442695
    %v797 = vpow.pop %v796
    %v798 = vmul.f32 %v795, 1.442695
    %v799 = vpow.pop %v798
    %v800 = vld [vmem:[%s4] sm:$0xff]
    %v801 = vld [vmem:[%s4 + $0x8] sm:$0xff]
    %804 = vrot.lane.b32.xlu0 %v797, 112
    %v805 = vpop.permute.xlu0 %804
    %806 = vrot.lane.b32.xlu0 %v799, 112
    %v807 = vpop.permute.xlu0 %806
    %v810 = vmul.f32 %v800, %v805
    %v811 = vmul.f32 %v801, %v807
    %v812 = vadd.f32 %v794, %v810
    %v813 = vadd.f32 %v795, %v811
    %814 = vst.msk [vmem:[#allocation2] sm:$0xff] %vm500, %v794
    %815 = vst.msk [vmem:[#allocation2 + $0x8] sm:$0xff] %vm500, %v795
    %818 = vrot.lane.b32.xlu0 %v812, 32
    %v819 = vpop.permute.xlu0 %818
    %820 = vrot.lane.b32.xlu0 %v813, 32
    %v821 = vpop.permute.xlu0 %820
    %vm824 = vcmask 392448
    %825 = vst.msk [vmem:[#allocation2] sm:$0xff] %vm824, %v819
    %826 = vst.msk [vmem:[#allocation2 + $0x8] sm:$0xff] %vm824, %v821
    %v827 = vlaneseq
    %v828 = vand.u32 %v827, 127
    %v829 = vld [vmem:[%s0] sm:$0xff]
    %830 = vset.pattern.permute.xlu0 0
    %831 = vperm.xlu0 %830, %v829
    %v832 = vpop.permute.xlu0 %831
    %vm833 = vcmp.eq.s32.totalorder %v828, %v832
    %v834 = vsel %vm833, 1, 0
    %v835 = vcvt.s32.f32 %v834
    %v836 = vpack.c.bf16 %v835, %v835
    %v837 = vld [vmem:[%s1] sm:$0xff]
    %838 = vset.pattern.permute.xlu0 0
    %839 = vperm.xlu0 %838, %v837
    %v840 = vpop.permute.xlu0 %839
    %vm841 = vcmp.eq.s32.totalorder %v828, %v840
    %v842 = vsel %vm841, 1, 0
    %v843 = vcvt.s32.f32 %v842
    %v844 = vpack.c.bf16 %v843, %v843
    %v845 = vpack.c.bf16 %v813, %v812
    %v847 = vsel %vm76, %v836, 0
    %849 = vmatprep.subr.bf16.mxu0 0
    %850 = vmatpush1.bf16.msra.mxu0 %v845
    %851 = vmatprep.subr.bf16.mxu0 0
    %852 = vmatpush1.bf16.msra.mxu0 0
    %853 = vmatprep.subr.bf16.mxu0 0
    %854 = vmatpush1.bf16.msra.mxu0 0
    %855 = vmatprep.subr.bf16.mxu0 0
    %856 = vmatpush1.bf16.msra.mxu0 0
    %857 = vmatprep.subr.bf16.mxu0 0
    %858 = vmatpush1.bf16.msra.mxu0 0
    %859 = vmatprep.subr.bf16.mxu0 0
    %860 = vmatpush1.bf16.msra.mxu0 0
    %861 = vmatprep.subr.bf16.mxu0 0
    %862 = vmatpush1.bf16.msra.mxu0 0
    %863 = vmatprep.subr.bf16.mxu0 0
    %864 = vmatpush1.bf16.msra.mxu0 0
    %865 = vmatprep.subr.bf16.mxu0 0
    %866 = vmatpush1.bf16.msra.mxu0 0
    %867 = vmatprep.subr.bf16.mxu0 0
    %868 = vmatpush1.bf16.msra.mxu0 0
    %869 = vmatprep.subr.bf16.mxu0 0
    %870 = vmatpush1.bf16.msra.mxu0 0
    %871 = vmatprep.subr.bf16.mxu0 0
    %872 = vmatpush1.bf16.msra.mxu0 0
    %873 = vmatprep.subr.bf16.mxu0 0
    %874 = vmatpush1.bf16.msra.mxu0 0
    %875 = vmatprep.subr.bf16.mxu0 0
    %876 = vmatpush1.bf16.msra.mxu0 0
    %877 = vmatprep.subr.bf16.mxu0 0
    %878 = vmatpush1.bf16.msra.mxu0 0
    %879 = vmatprep.subr.bf16.mxu0 0
    %880 = vmatpush1.bf16.msra.mxu0 0
    %881 = vmatprep.mubr.bf16.mxu0 0
    %882 = vmatmul.mubr.bf16.gmra.mrb[0].mxu0 %v847
    %v883 = vpop.f32.mrb[0].mxu0
    %v884 = vadd.f32 0.0, %v883
    %v885 = vpop.f32.mrb[0].mxu0
    %v886 = vpop.f32.mrb[0].mxu0
    %v887 = vpop.f32.mrb[0].mxu0
    %888 = vdwg.mxu0
    %v890 = vsel %vm76, %v844, 0
    %892 = vmatprep.subr.bf16.mxu0 0
    %893 = vmatpush1.bf16.msra.mxu0 %v845
    %894 = vmatprep.subr.bf16.mxu0 0
    %895 = vmatpush1.bf16.msra.mxu0 0
    %896 = vmatprep.subr.bf16.mxu0 0
    %897 = vmatpush1.bf16.msra.mxu0 0
    %898 = vmatprep.subr.bf16.mxu0 0
    %899 = vmatpush1.bf16.msra.mxu0 0
    %900 = vmatprep.subr.bf16.mxu0 0
    %901 = vmatpush1.bf16.msra.mxu0 0
    %902 = vmatprep.subr.bf16.mxu0 0
    %903 = vmatpush1.bf16.msra.mxu0 0
    %904 = vmatprep.subr.bf16.mxu0 0
    %905 = vmatpush1.bf16.msra.mxu0 0
    %906 = vmatprep.subr.bf16.mxu0 0
    %907 = vmatpush1.bf16.msra.mxu0 0
    %908 = vmatprep.subr.bf16.mxu0 0
    %909 = vmatpush1.bf16.msra.mxu0 0
    %910 = vmatprep.subr.bf16.mxu0 0
    %911 = vmatpush1.bf16.msra.mxu0 0
    %912 = vmatprep.subr.bf16.mxu0 0
    %913 = vmatpush1.bf16.msra.mxu0 0
    %914 = vmatprep.subr.bf16.mxu0 0
    %915 = vmatpush1.bf16.msra.mxu0 0
    %916 = vmatprep.subr.bf16.mxu0 0
    %917 = vmatpush1.bf16.msra.mxu0 0
    %918 = vmatprep.subr.bf16.mxu0 0
    %919 = vmatpush1.bf16.msra.mxu0 0
    %920 = vmatprep.subr.bf16.mxu0 0
    %921 = vmatpush1.bf16.msra.mxu0 0
    %922 = vmatprep.subr.bf16.mxu0 0
    %923 = vmatpush1.bf16.msra.mxu0 0
    %924 = vmatprep.mubr.bf16.mxu0 0
    %925 = vmatmul.mubr.bf16.gmra.mrb[0].mxu0 %v890
    %v926 = vpop.f32.mrb[0].mxu0
    %v927 = vadd.f32 0.0, %v926
    %v928 = vpop.f32.mrb[0].mxu0
    %v929 = vpop.f32.mrb[0].mxu0
    %v930 = vpop.f32.mrb[0].mxu0
    %931 = vdwg.mxu0
    %v932 = vld [vmem:[%s7] sm:$0xf]
    %v933 = vld [vmem:[%s7 + $0x4] sm:$0xf]
    %v934 = vld [vmem:[%s7 + $0x8] sm:$0xf]
    %v935 = vld [vmem:[%s7 + $0xc] sm:$0xf]
    %v936 = vpack.c.bf16 %v884, %v884
    %v937 = vpack.c.bf16 %v927, %v927
    %v940 = vunpack.c.l.b16 %v934
    %v941 = vunpack.c.l.b16 %v935
    %v942 = vpack.c.b16 %v941, %v940
    %v945 = vsel %vm76, %v937, 0
    %947 = vmatprep.subr.bf16.mxu0 0
    %948 = vmatpush1.bf16.msra.mxu0 %v942
    %949 = vmatprep.subr.bf16.mxu0 0
    %950 = vmatpush1.bf16.msra.mxu0 0
    %951 = vmatprep.subr.bf16.mxu0 0
    %952 = vmatpush1.bf16.msra.mxu0 0
    %953 = vmatprep.subr.bf16.mxu0 0
    %954 = vmatpush1.bf16.msra.mxu0 0
    %955 = vmatprep.subr.bf16.mxu0 0
    %956 = vmatpush1.bf16.msra.mxu0 0
    %957 = vmatprep.subr.bf16.mxu0 0
    %958 = vmatpush1.bf16.msra.mxu0 0
    %959 = vmatprep.subr.bf16.mxu0 0
    %960 = vmatpush1.bf16.msra.mxu0 0
    %961 = vmatprep.subr.bf16.mxu0 0
    %962 = vmatpush1.bf16.msra.mxu0 0
    %963 = vmatprep.subr.bf16.mxu0 0
    %964 = vmatpush1.bf16.msra.mxu0 0
    %965 = vmatprep.subr.bf16.mxu0 0
    %966 = vmatpush1.bf16.msra.mxu0 0
    %967 = vmatprep.subr.bf16.mxu0 0
    %968 = vmatpush1.bf16.msra.mxu0 0
    %969 = vmatprep.subr.bf16.mxu0 0
    %970 = vmatpush1.bf16.msra.mxu0 0
    %971 = vmatprep.subr.bf16.mxu0 0
    %972 = vmatpush1.bf16.msra.mxu0 0
    %973 = vmatprep.subr.bf16.mxu0 0
    %974 = vmatpush1.bf16.msra.mxu0 0
    %975 = vmatprep.subr.bf16.mxu0 0
    %976 = vmatpush1.bf16.msra.mxu0 0
    %977 = vmatprep.subr.bf16.mxu0 0
    %978 = vmatpush1.bf16.msra.mxu0 0
    %979 = vmatprep.mubr.bf16.mxu0 0
    %980 = vmatmul.mubr.bf16.gmra.mrb[0].mxu0 %v945
    %v981 = vpop.f32.mrb[0].mxu0
    %v982 = vadd.f32 0.0, %v981
    %v983 = vpop.f32.mrb[0].mxu0
    %v984 = vpop.f32.mrb[0].mxu0
    %v985 = vpop.f32.mrb[0].mxu0
    %986 = vdwg.mxu0
    %v989 = vunpack.c.l.b16 %v932
    %v990 = vunpack.c.l.b16 %v933
    %v991 = vpack.c.b16 %v990, %v989
    %v994 = vsel %vm76, %v936, 0
    %996 = vmatprep.subr.bf16.mxu0 0
    %997 = vmatpush1.bf16.msra.mxu0 %v991
    %998 = vmatprep.subr.bf16.mxu0 0
    %999 = vmatpush1.bf16.msra.mxu0 0
    %1000 = vmatprep.subr.bf16.mxu0 0
    %1001 = vmatpush1.bf16.msra.mxu0 0
    %1002 = vmatprep.subr.bf16.mxu0 0
    %1003 = vmatpush1.bf16.msra.mxu0 0
    %1004 = vmatprep.subr.bf16.mxu0 0
    %1005 = vmatpush1.bf16.msra.mxu0 0
    %1006 = vmatprep.subr.bf16.mxu0 0
    %1007 = vmatpush1.bf16.msra.mxu0 0
    %1008 = vmatprep.subr.bf16.mxu0 0
    %1009 = vmatpush1.bf16.msra.mxu0 0
    %1010 = vmatprep.subr.bf16.mxu0 0
    %1011 = vmatpush1.bf16.msra.mxu0 0
    %1012 = vmatprep.subr.bf16.mxu0 0
    %1013 = vmatpush1.bf16.msra.mxu0 0
    %1014 = vmatprep.subr.bf16.mxu0 0
    %1015 = vmatpush1.bf16.msra.mxu0 0
    %1016 = vmatprep.subr.bf16.mxu0 0
    %1017 = vmatpush1.bf16.msra.mxu0 0
    %1018 = vmatprep.subr.bf16.mxu0 0
    %1019 = vmatpush1.bf16.msra.mxu0 0
    %1020 = vmatprep.subr.bf16.mxu0 0
    %1021 = vmatpush1.bf16.msra.mxu0 0
    %1022 = vmatprep.subr.bf16.mxu0 0
    %1023 = vmatpush1.bf16.msra.mxu0 0
    %1024 = vmatprep.subr.bf16.mxu0 0
    %1025 = vmatpush1.bf16.msra.mxu0 0
    %1026 = vmatprep.subr.bf16.mxu0 0
    %1027 = vmatpush1.bf16.msra.mxu0 0
    %1028 = vmatprep.mubr.bf16.mxu0 0
    %1029 = vmatmul.mubr.bf16.gmra.mrb[0].mxu0 %v994
    %v1030 = vpop.f32.mrb[0].mxu0
    %v1031 = vadd.f32 %v982, %v1030
    %v1032 = vpop.f32.mrb[0].mxu0
    %v1033 = vpop.f32.mrb[0].mxu0
    %v1034 = vpop.f32.mrb[0].mxu0
    %1035 = vdwg.mxu0
    %v1036 = vlaneseq
    %v1037 = vshrl.u32 %v1036, 7
    %v1038 = vsub.s32 0, %v1037
    %v1039 = vrot.slane %v50, %v1038
    %v1040 = vadd.f32 %v1031, %v1039
    %v1041 = vmax.f32 %v1040, 0.0
    %v1042 = vpack.c.bf16 %v1041, %v1041
    %v1043 = vld [vmem:[%s8] sm:$0xf]
    %v1044 = vld [vmem:[%s8 + $0x4] sm:$0xf]
    %v1045 = vld [vmem:[%s8 + $0x8] sm:$0xf]
    %v1046 = vld [vmem:[%s8 + $0xc] sm:$0xf]
    %v1047 = vld [vmem:[%s8 + $0x10] sm:$0xf]
    %v1048 = vld [vmem:[%s8 + $0x14] sm:$0xf]
    %v1049 = vld [vmem:[%s8 + $0x18] sm:$0xf]
    %v1050 = vld [vmem:[%s8 + $0x1c] sm:$0xf]
    %v1051 = vld [vmem:[%s8 + $0x20] sm:$0xf]
    %v1052 = vld [vmem:[%s8 + $0x24] sm:$0xf]
    %v1053 = vld [vmem:[%s8 + $0x28] sm:$0xf]
    %v1054 = vld [vmem:[%s8 + $0x2c] sm:$0xf]
    %v1055 = vld [vmem:[%s8 + $0x30] sm:$0xf]
    %v1056 = vld [vmem:[%s8 + $0x34] sm:$0xf]
    %v1057 = vld [vmem:[%s8 + $0x38] sm:$0xf]
    %v1058 = vld [vmem:[%s8 + $0x3c] sm:$0xf]
    %v1059 = vlaneseq
    %v1060 = vshrl.u32 %v1059, 7
    %v1061 = vsub.s32 0, %v1060
    %v1062 = vrot.slane %v51, %v1061
    %v1079 = vunpack.c.l.b16 %v1043
    %v1080 = vunpack.c.l.b16 %v1044
    %v1081 = vunpack.c.l.b16 %v1045
    %v1082 = vunpack.c.l.b16 %v1046
    %v1083 = vunpack.c.l.b16 %v1047
    %v1084 = vunpack.c.l.b16 %v1048
    %v1085 = vunpack.c.l.b16 %v1049
    %v1086 = vunpack.c.l.b16 %v1050
    %v1087 = vunpack.c.l.b16 %v1051
    %v1088 = vunpack.c.l.b16 %v1052
    %v1089 = vunpack.c.l.b16 %v1053
    %v1090 = vunpack.c.l.b16 %v1054
    %v1091 = vunpack.c.l.b16 %v1055
    %v1092 = vunpack.c.l.b16 %v1056
    %v1093 = vunpack.c.l.b16 %v1057
    %v1094 = vunpack.c.l.b16 %v1058
    %v1095 = vpack.c.b16 %v1080, %v1079
    %v1096 = vpack.c.b16 %v1082, %v1081
    %v1097 = vpack.c.b16 %v1084, %v1083
    %v1098 = vpack.c.b16 %v1086, %v1085
    %v1099 = vpack.c.b16 %v1088, %v1087
    %v1100 = vpack.c.b16 %v1090, %v1089
    %v1101 = vpack.c.b16 %v1092, %v1091
    %v1102 = vpack.c.b16 %v1094, %v1093
    %1111 = vmatprep.subr.bf16.mxu0 0
    %1112 = vmatpush1.bf16.msra.mxu0 %v1095
    %1113 = vmatprep.subr.bf16.mxu0 0
    %1114 = vmatpush1.bf16.msra.mxu0 %v1096
    %1115 = vmatprep.subr.bf16.mxu0 0
    %1116 = vmatpush1.bf16.msra.mxu0 %v1097
    %1117 = vmatprep.subr.bf16.mxu0 0
    %1118 = vmatpush1.bf16.msra.mxu0 %v1098
    %1119 = vmatprep.subr.bf16.mxu0 0
    %1120 = vmatpush1.bf16.msra.mxu0 %v1099
    %1121 = vmatprep.subr.bf16.mxu0 0
    %1122 = vmatpush1.bf16.msra.mxu0 %v1100
    %1123 = vmatprep.subr.bf16.mxu0 0
    %1124 = vmatpush1.bf16.msra.mxu0 %v1101
    %1125 = vmatprep.subr.bf16.mxu0 0
    %1126 = vmatpush1.bf16.msra.mxu0 %v1102
    %1127 = vmatprep.subr.bf16.mxu0 0
    %1128 = vmatpush1.bf16.msra.mxu0 0
    %1129 = vmatprep.subr.bf16.mxu0 0
    %1130 = vmatpush1.bf16.msra.mxu0 0
    %1131 = vmatprep.subr.bf16.mxu0 0
    %1132 = vmatpush1.bf16.msra.mxu0 0
    %1133 = vmatprep.subr.bf16.mxu0 0
    %1134 = vmatpush1.bf16.msra.mxu0 0
    %1135 = vmatprep.subr.bf16.mxu0 0
    %1136 = vmatpush1.bf16.msra.mxu0 0
    %1137 = vmatprep.subr.bf16.mxu0 0
    %1138 = vmatpush1.bf16.msra.mxu0 0
    %1139 = vmatprep.subr.bf16.mxu0 0
    %1140 = vmatpush1.bf16.msra.mxu0 0
    %1141 = vmatprep.subr.bf16.mxu0 0
    %1142 = vmatpush1.bf16.msra.mxu0 0
    %1143 = vmatprep.mubr.bf16.mxu0 0
    %1144 = vmatmul.mubr.bf16.gmra.mrb[0].mxu0 %v1042
    %v1145 = vpop.f32.mrb[0].mxu0
    %v1146 = vadd.f32 %v1062, %v1145
    %v1147 = vpop.f32.mrb[0].mxu0
    %v1148 = vpop.f32.mrb[0].mxu0
    %v1149 = vpop.f32.mrb[0].mxu0
    %1150 = vdwg.mxu0
    %vm1151 = vcmp.eq.s32.totalorder %v828, 0
    %v1152 = vxor.u32 %v1146, 2147483648
    %v1153 = vmul.f32 %v1152, 1.442695
    %v1154 = vpow.pop %v1153
    %v1155 = vadd.f32 %v1154, 1.0
    %v1156 = vrcp.pop %v1155
    %v1157 = vmul.f32 1.0, %v1156
    %v1158 = vsel %vm1151, %v1157, %v1146
    %vm1159 = vcmask 39936
    %1160 = vst.msk [vmem:[#allocation4] sm:$0xff] %vm1159, %v1158
    // Predicated region
    $region42: #{tpu_custom_call.1} parent=1 // pred_check
      _
    $region43: #{tpu_custom_call.1} parent=1 // pred_check_branch
      %1162 = sbr.rel (0) target = $region45
    $region44: #{tpu_custom_call.1} parent=1 // pred_region
      %s1164 = ssub.s32 256, 256
      %1165 = vsyncadd [#allocation3], %s1164
      %s1166 = sshll.u32 [#allocation2], 4
      %s1167 = int_to_ptr.vmem [resolvable:$true] %s1166
      %1172 = dma.vmem_to_hbm [thread:$0]  %s1167, 256, %s10, [#allocation3], 128, 128, 8
    $region45: #{tpu_custom_call.1} parent=1 // pred_fallthru
      _
    // Predicated region
    $region46: #{tpu_custom_call.1} parent=1 // pred_check
      _
    $region47: #{tpu_custom_call.1} parent=1 // pred_check_branch
      %1174 = sbr.rel (0) target = $region49
    $region48: #{tpu_custom_call.1} parent=1 // pred_region
      %s1176 = ssub.s32 128, 128
      %1177 = vsyncadd [#allocation5], %s1176
      %s1179 = sshll.u32 [#allocation4], 4
      %s1180 = int_to_ptr.vmem [resolvable:$true] %s1179
      %1182 = dma.vmem_to_hbm [thread:$0]  %s1180, 128, %s11, [#allocation5]
    $region49: #{tpu_custom_call.1} parent=1 // pred_fallthru
      _
    // Predicated region
    $region50: #{tpu_custom_call.1} parent=1 // pred_check
      _
    $region51: #{tpu_custom_call.1} parent=1 // pred_check_branch
      %1184 = sbr.rel (0) target = $region53
    $region52: #{tpu_custom_call.1} parent=1 // pred_region
      %1185 = dma.done [#allocation3], 256
    $region53: #{tpu_custom_call.1} parent=1 // pred_fallthru
      _
    // Predicated region
    $region54: #{tpu_custom_call.1} parent=1 // pred_check
      _
    $region55: #{tpu_custom_call.1} parent=1 // pred_check_branch
      %1187 = sbr.rel (0) target = $region57
    $region56: #{tpu_custom_call.1} parent=1 // pred_region
      %1188 = dma.done [#allocation5], 128
    $region57: #{tpu_custom_call.1} parent=1 // pred_fallthru
      _
    %1189 = vsyncpa [#allocation3], 1
    %1190 = vsyncpa [#allocation5], 1

</llo_original>
